<compile_context>
chip_gen: v6e
topology: v6e:2x2x1
jax: 0.10.0
libtpu: 0.0.40
codegen_flags: <defaults>
</compile_context>

<pallas_src>
import math
import functools

import jax
import jax.numpy as jnp
from jax.experimental import pallas as pl
from jax.experimental.pallas import tpu as pltpu


def _token_embedding_gather_kernel(tok_ref, emb_hbm, out_ref, row_buf, sem,
                                   *, scale, tile_m, chunk):
    # tok_ref : (N_pad,) int32 in SMEM      -- scalar-prefetched token ids
    # emb_hbm : (V, E) table ref, memory_space=pl.ANY (stays in HBM)
    # out_ref : (tile_m, E) VMEM output tile (auto double-buffered by Pallas)
    # row_buf : (2, chunk, E) VMEM gather double buffer
    # sem     : (2, chunk) DMA semaphores (one per in-flight row DMA)
    n_chunks = tile_m // chunk
    base = pl.program_id(0) * tile_m

    def issue_chunk(c, slot):
        # Read token ids (SMEM) and launch `chunk` overlapped row-gather DMAs.
        for r in range(chunk):
            tok = tok_ref[base + c * chunk + r]
            pltpu.make_async_copy(
                emb_hbm.at[pl.ds(tok, 1), :],
                row_buf.at[slot, pl.ds(r, 1), :],
                sem.at[slot, r],
            ).start()

    def wait_chunk(slot):
        for r in range(chunk):
            # Source index is shape-only here; the semaphore carries the count.
            pltpu.make_async_copy(
                emb_hbm.at[pl.ds(0, 1), :],
                row_buf.at[slot, pl.ds(r, 1), :],
                sem.at[slot, r],
            ).wait()

    # Prime the pipeline with chunk 0, then rolling issue/wait/scale.
    issue_chunk(0, 0)
    for c in range(n_chunks):
        slot = c & 1
        if c + 1 < n_chunks:
            # Issue the next chunk (and do its SMEM id reads) BEFORE any wait.
            issue_chunk(c + 1, 1 - slot)
        wait_chunk(slot)
        rows = row_buf[slot]                               # (chunk, E)
        out_ref[pl.ds(c * chunk, chunk), :] = (
            rows.astype(jnp.float32) * scale).astype(out_ref.dtype)


def _round_up(x, m):
    return (x + m - 1) // m * m


def token_embedding(tokens, emb_table, *, tile_m=256, chunk=16):
    """tokens: (B, S) integer array. emb_table: (V, E) float.

    Returns (B, S, E) == embedding(tokens) * sqrt(E), matching the PyTorch
    TokenEmbedding forward.
    """
    B, S = tokens.shape
    V, E = emb_table.shape
    N = B * S
    itemsize = jnp.dtype(emb_table.dtype).itemsize
    scale = math.sqrt(E)

    # ---- tile sizing -------------------------------------------------------
    # VMEM resident per step ~= 2*tile_m*E (pipelined out tile) + 2*chunk*E
    # (gather double buffer).  Cap so it fits comfortably on every generation
    # (v7x: 64 MiB physical / 32 MiB scoped default; v5e: 16 MiB scoped).
    budget = 24 * (1 << 20)
    cap = max(8, (budget // (4 * E * itemsize)) // 8 * 8)
    tm = min(tile_m, _round_up(N, 8), cap)
    tm = max(8, tm - tm % 8)

    # Prefer a tile that divides N exactly -> no padding and no post-kernel
    # slice (which would otherwise re-copy the whole output in HBM).
    if N % 8 == 0:
        for t in range(tm, 7, -8):
            if N % t == 0:
                if 2 * t >= tm:
                    tm = t
                break

    n_pad = _round_up(N, tm)
    n_tiles = n_pad // tm

    ck = min(chunk, tm)
    ck = max(8, ck - ck % 8)
    while tm % ck != 0:
        ck -= 8

    # ---- token ids ---------------------------------------------------------
    # Clamp ids instead of letting an out-of-range id become an OOB HBM DMA
    # (PyTorch's nn.Embedding would raise an IndexError here).
    tok_flat = jnp.clip(tokens.reshape(N).astype(jnp.int32), 0, V - 1)
    if n_pad != N:
        tok_flat = jnp.pad(tok_flat, (0, n_pad - N))   # padded rows gather row 0
    # NOTE: the whole (n_pad,) id vector lives in SMEM via scalar prefetch;
    # for very long sequences (~1e5+ tokens) split the launch over token chunks.

    needed = 2 * tm * E * itemsize + 2 * ck * E * itemsize
    vmem_limit = int(min(max(2 * needed + (4 << 20), 32 << 20), 48 << 20))

    kernel = functools.partial(_token_embedding_gather_kernel,
                               scale=scale, tile_m=tm, chunk=ck)

    out_flat = pl.pallas_call(
        kernel,
        out_shape=jax.ShapeDtypeStruct((n_pad, E), emb_table.dtype),
        grid_spec=pltpu.PrefetchScalarGridSpec(
            num_scalar_prefetch=1,                       # token ids -> SMEM
            grid=(n_tiles,),
            in_specs=[
                # Embedding table: leave it in HBM, gather rows manually.
                pl.BlockSpec(memory_space=pl.ANY),
            ],
            out_specs=pl.BlockSpec((tm, E), lambda i, tok: (i, 0)),
            scratch_shapes=[
                pltpu.VMEM((2, ck, E), emb_table.dtype),  # gather double buffer
                pltpu.SemaphoreType.DMA((2, ck)),         # one sem per row DMA
            ],
        ),
        compiler_params=pltpu.CompilerParams(
            dimension_semantics=("parallel",),            # v7x: shard across TCs
            vmem_limit_bytes=vmem_limit),
        cost_estimate=pl.CostEstimate(
            flops=N * E, transcendentals=0,
            bytes_accessed=2 * N * E * itemsize + 4 * N),
    )(tok_flat, emb_table)

    if n_pad != N:
        out_flat = out_flat[:N]
    return out_flat.reshape(B, S, E)


if __name__ == "__main__":
    VOCAB = 64
    EMB = 128
    B, S = 2, 8

    key = jax.random.PRNGKey(0)
    k_tok, k_emb = jax.random.split(key)

    # Deterministic "parameters": nn.Embedding default init is N(0, 1).
    emb_table = jax.random.normal(k_emb, (VOCAB, EMB), dtype=jnp.float32)
    tokens = jax.random.randint(k_tok, (B, S), 0, VOCAB, dtype=jnp.int32)

    out = jax.block_until_ready(token_embedding(tokens, emb_table))

    # Reference check (plain JAX gather).
    ref = jnp.take(emb_table, tokens, axis=0) * math.sqrt(EMB)
    assert out.shape == (B, S, EMB)
    assert jnp.allclose(out, ref, atol=1e-5, rtol=1e-5)

    print("KERNEL_OK")
</pallas_src>

<mosaic_0001>
module attributes {stable_mosaic.version = 11 : i64} {
  func.func @_token_embedding_gather_kernel(%arg0: i32, %arg1: memref<16xi32, #tpu.memory_space<smem>>, %arg2: memref<64x128xf32, #tpu.memory_space<any>>, %arg3: memref<16x128xf32, #tpu.memory_space<vmem>>, %arg4: memref<2x16x128xf32, #tpu.memory_space<vmem>>, %arg5: memref<2x16x!tpu.dma_semaphore, #tpu.memory_space<semaphore_mem>>) attributes {dimension_semantics = [#tpu.dimension_semantics<parallel>], iteration_bounds = array<i64: 1>, scalar_prefetch = 1 : i64, scratch_operands = 2 : i64, tpu.core_type = #tpu.core_type<tc>, window_params = [{}, {transform_indices = @transform_1, window_bounds = array<i64: 16, 128>}]} {
    %c16_i32 = arith.constant 16 : i32
    %0 = arith.muli %arg0, %c16_i32 : i32
    %c0_i32 = arith.constant 0 : i32
    %1 = arith.addi %0, %c0_i32 : i32
    %c0_i32_0 = arith.constant 0 : i32
    %2 = arith.addi %1, %c0_i32_0 : i32
    %3 = arith.index_cast %2 : i32 to index
    %4 = memref.load %arg1[%3] : memref<16xi32, #tpu.memory_space<smem>>
    %c0_i32_1 = arith.constant 0 : i32
    %c0_i32_2 = arith.constant 0 : i32
    %c0_i32_3 = arith.constant 0 : i32
    %c0_i32_4 = arith.constant 0 : i32
    %5 = tpu.memref_slice %arg2[%4, %c0_i32_4] : memref<64x128xf32, #tpu.memory_space<any>> -> memref<1x128xf32, #tpu.memory_space<any>>
    %c0_i32_5 = arith.constant 0 : i32
    %c0_i32_6 = arith.constant 0 : i32
    %6 = tpu.memref_slice %arg4[%c0_i32_1, %c0_i32_5, %c0_i32_6] : memref<2x16x128xf32, #tpu.memory_space<vmem>> -> memref<1x1x128xf32, #tpu.memory_space<vmem>>
    %7 = tpu.memref_squeeze %6 : memref<1x1x128xf32, #tpu.memory_space<vmem>> -> memref<1x128xf32, #tpu.memory_space<vmem>>
    %8 = tpu.memref_slice %arg5[%c0_i32_2, %c0_i32_3] : memref<2x16x!tpu.dma_semaphore, #tpu.memory_space<semaphore_mem>> -> memref<1x1x!tpu.dma_semaphore, #tpu.memory_space<semaphore_mem>>
    %9 = tpu.memref_squeeze %8 : memref<1x1x!tpu.dma_semaphore, #tpu.memory_space<semaphore_mem>> -> memref<!tpu.dma_semaphore, #tpu.memory_space<semaphore_mem>>
    tpu.enqueue_dma source(%5 : memref<1x128xf32, #tpu.memory_space<any>>) target(%7 : memref<1x128xf32, #tpu.memory_space<vmem>>) target_semaphore(%9 : memref<!tpu.dma_semaphore, #tpu.memory_space<semaphore_mem>>)
    %c0_i32_7 = arith.constant 0 : i32
    %10 = arith.addi %0, %c0_i32_7 : i32
    %c1_i32 = arith.constant 1 : i32
    %11 = arith.addi %10, %c1_i32 : i32
    %12 = arith.index_cast %11 : i32 to index
    %13 = memref.load %arg1[%12] : memref<16xi32, #tpu.memory_space<smem>>
    %c0_i32_8 = arith.constant 0 : i32
    %c0_i32_9 = arith.constant 0 : i32
    %c1_i32_10 = arith.constant 1 : i32
    %c0_i32_11 = arith.constant 0 : i32
    %14 = tpu.memref_slice %arg2[%13, %c0_i32_11] : memref<64x128xf32, #tpu.memory_space<any>> -> memref<1x128xf32, #tpu.memory_space<any>>
    %c1_i32_12 = arith.constant 1 : i32
    %c0_i32_13 = arith.constant 0 : i32
    %15 = tpu.memref_slice %arg4[%c0_i32_8, %c1_i32_12, %c0_i32_13] : memref<2x16x128xf32, #tpu.memory_space<vmem>> -> memref<1x1x128xf32, #tpu.memory_space<vmem>>
    %16 = tpu.memref_squeeze %15 : memref<1x1x128xf32, #tpu.memory_space<vmem>> -> memref<1x128xf32, #tpu.memory_space<vmem>>
    %17 = tpu.memref_slice %arg5[%c0_i32_9, %c1_i32_10] : memref<2x16x!tpu.dma_semaphore, #tpu.memory_space<semaphore_mem>> -> memref<1x1x!tpu.dma_semaphore, #tpu.memory_space<semaphore_mem>>
    %18 = tpu.memref_squeeze %17 : memref<1x1x!tpu.dma_semaphore, #tpu.memory_space<semaphore_mem>> -> memref<!tpu.dma_semaphore, #tpu.memory_space<semaphore_mem>>
    tpu.enqueue_dma source(%14 : memref<1x128xf32, #tpu.memory_space<any>>) target(%16 : memref<1x128xf32, #tpu.memory_space<vmem>>) target_semaphore(%18 : memref<!tpu.dma_semaphore, #tpu.memory_space<semaphore_mem>>)
    %c0_i32_14 = arith.constant 0 : i32
    %19 = arith.addi %0, %c0_i32_14 : i32
    %c2_i32 = arith.constant 2 : i32
    %20 = arith.addi %19, %c2_i32 : i32
    %21 = arith.index_cast %20 : i32 to index
    %22 = memref.load %arg1[%21] : memref<16xi32, #tpu.memory_space<smem>>
    %c0_i32_15 = arith.constant 0 : i32
    %c0_i32_16 = arith.constant 0 : i32
    %c2_i32_17 = arith.constant 2 : i32
    %c0_i32_18 = arith.constant 0 : i32
    %23 = tpu.memref_slice %arg2[%22, %c0_i32_18] : memref<64x128xf32, #tpu.memory_space<any>> -> memref<1x128xf32, #tpu.memory_space<any>>
    %c2_i32_19 = arith.constant 2 : i32
    %c0_i32_20 = arith.constant 0 : i32
    %24 = tpu.memref_slice %arg4[%c0_i32_15, %c2_i32_19, %c0_i32_20] : memref<2x16x128xf32, #tpu.memory_space<vmem>> -> memref<1x1x128xf32, #tpu.memory_space<vmem>>
    %25 = tpu.memref_squeeze %24 : memref<1x1x128xf32, #tpu.memory_space<vmem>> -> memref<1x128xf32, #tpu.memory_space<vmem>>
    %26 = tpu.memref_slice %arg5[%c0_i32_16, %c2_i32_17] : memref<2x16x!tpu.dma_semaphore, #tpu.memory_space<semaphore_mem>> -> memref<1x1x!tpu.dma_semaphore, #tpu.memory_space<semaphore_mem>>
    %27 = tpu.memref_squeeze %26 : memref<1x1x!tpu.dma_semaphore, #tpu.memory_space<semaphore_mem>> -> memref<!tpu.dma_semaphore, #tpu.memory_space<semaphore_mem>>
    tpu.enqueue_dma source(%23 : memref<1x128xf32, #tpu.memory_space<any>>) target(%25 : memref<1x128xf32, #tpu.memory_space<vmem>>) target_semaphore(%27 : memref<!tpu.dma_semaphore, #tpu.memory_space<semaphore_mem>>)
    %c0_i32_21 = arith.constant 0 : i32
    %28 = arith.addi %0, %c0_i32_21 : i32
    %c3_i32 = arith.constant 3 : i32
    %29 = arith.addi %28, %c3_i32 : i32
    %30 = arith.index_cast %29 : i32 to index
    %31 = memref.load %arg1[%30] : memref<16xi32, #tpu.memory_space<smem>>
    %c0_i32_22 = arith.constant 0 : i32
    %c0_i32_23 = arith.constant 0 : i32
    %c3_i32_24 = arith.constant 3 : i32
    %c0_i32_25 = arith.constant 0 : i32
    %32 = tpu.memref_slice %arg2[%31, %c0_i32_25] : memref<64x128xf32, #tpu.memory_space<any>> -> memref<1x128xf32, #tpu.memory_space<any>>
    %c3_i32_26 = arith.constant 3 : i32
    %c0_i32_27 = arith.constant 0 : i32
    %33 = tpu.memref_slice %arg4[%c0_i32_22, %c3_i32_26, %c0_i32_27] : memref<2x16x128xf32, #tpu.memory_space<vmem>> -> memref<1x1x128xf32, #tpu.memory_space<vmem>>
    %34 = tpu.memref_squeeze %33 : memref<1x1x128xf32, #tpu.memory_space<vmem>> -> memref<1x128xf32, #tpu.memory_space<vmem>>
    %35 = tpu.memref_slice %arg5[%c0_i32_23, %c3_i32_24] : memref<2x16x!tpu.dma_semaphore, #tpu.memory_space<semaphore_mem>> -> memref<1x1x!tpu.dma_semaphore, #tpu.memory_space<semaphore_mem>>
    %36 = tpu.memref_squeeze %35 : memref<1x1x!tpu.dma_semaphore, #tpu.memory_space<semaphore_mem>> -> memref<!tpu.dma_semaphore, #tpu.memory_space<semaphore_mem>>
    tpu.enqueue_dma source(%32 : memref<1x128xf32, #tpu.memory_space<any>>) target(%34 : memref<1x128xf32, #tpu.memory_space<vmem>>) target_semaphore(%36 : memref<!tpu.dma_semaphore, #tpu.memory_space<semaphore_mem>>)
    %c0_i32_28 = arith.constant 0 : i32
    %37 = arith.addi %0, %c0_i32_28 : i32
    %c4_i32 = arith.constant 4 : i32
    %38 = arith.addi %37, %c4_i32 : i32
    %39 = arith.index_cast %38 : i32 to index
    %40 = memref.load %arg1[%39] : memref<16xi32, #tpu.memory_space<smem>>
    %c0_i32_29 = arith.constant 0 : i32
    %c0_i32_30 = arith.constant 0 : i32
    %c4_i32_31 = arith.constant 4 : i32
    %c0_i32_32 = arith.constant 0 : i32
    %41 = tpu.memref_slice %arg2[%40, %c0_i32_32] : memref<64x128xf32, #tpu.memory_space<any>> -> memref<1x128xf32, #tpu.memory_space<any>>
    %c4_i32_33 = arith.constant 4 : i32
    %c0_i32_34 = arith.constant 0 : i32
    %42 = tpu.memref_slice %arg4[%c0_i32_29, %c4_i32_33, %c0_i32_34] : memref<2x16x128xf32, #tpu.memory_space<vmem>> -> memref<1x1x128xf32, #tpu.memory_space<vmem>>
    %43 = tpu.memref_squeeze %42 : memref<1x1x128xf32, #tpu.memory_space<vmem>> -> memref<1x128xf32, #tpu.memory_space<vmem>>
    %44 = tpu.memref_slice %arg5[%c0_i32_30, %c4_i32_31] : memref<2x16x!tpu.dma_semaphore, #tpu.memory_space<semaphore_mem>> -> memref<1x1x!tpu.dma_semaphore, #tpu.memory_space<semaphore_mem>>
    %45 = tpu.memref_squeeze %44 : memref<1x1x!tpu.dma_semaphore, #tpu.memory_space<semaphore_mem>> -> memref<!tpu.dma_semaphore, #tpu.memory_space<semaphore_mem>>
    tpu.enqueue_dma source(%41 : memref<1x128xf32, #tpu.memory_space<any>>) target(%43 : memref<1x128xf32, #tpu.memory_space<vmem>>) target_semaphore(%45 : memref<!tpu.dma_semaphore, #tpu.memory_space<semaphore_mem>>)
    %c0_i32_35 = arith.constant 0 : i32
    %46 = arith.addi %0, %c0_i32_35 : i32
    %c5_i32 = arith.constant 5 : i32
    %47 = arith.addi %46, %c5_i32 : i32
    %48 = arith.index_cast %47 : i32 to index
    %49 = memref.load %arg1[%48] : memref<16xi32, #tpu.memory_space<smem>>
    %c0_i32_36 = arith.constant 0 : i32
    %c0_i32_37 = arith.constant 0 : i32
    %c5_i32_38 = arith.constant 5 : i32
    %c0_i32_39 = arith.constant 0 : i32
    %50 = tpu.memref_slice %arg2[%49, %c0_i32_39] : memref<64x128xf32, #tpu.memory_space<any>> -> memref<1x128xf32, #tpu.memory_space<any>>
    %c5_i32_40 = arith.constant 5 : i32
    %c0_i32_41 = arith.constant 0 : i32
    %51 = tpu.memref_slice %arg4[%c0_i32_36, %c5_i32_40, %c0_i32_41] : memref<2x16x128xf32, #tpu.memory_space<vmem>> -> memref<1x1x128xf32, #tpu.memory_space<vmem>>
    %52 = tpu.memref_squeeze %51 : memref<1x1x128xf32, #tpu.memory_space<vmem>> -> memref<1x128xf32, #tpu.memory_space<vmem>>
    %53 = tpu.memref_slice %arg5[%c0_i32_37, %c5_i32_38] : memref<2x16x!tpu.dma_semaphore, #tpu.memory_space<semaphore_mem>> -> memref<1x1x!tpu.dma_semaphore, #tpu.memory_space<semaphore_mem>>
    %54 = tpu.memref_squeeze %53 : memref<1x1x!tpu.dma_semaphore, #tpu.memory_space<semaphore_mem>> -> memref<!tpu.dma_semaphore, #tpu.memory_space<semaphore_mem>>
    tpu.enqueue_dma source(%50 : memref<1x128xf32, #tpu.memory_space<any>>) target(%52 : memref<1x128xf32, #tpu.memory_space<vmem>>) target_semaphore(%54 : memref<!tpu.dma_semaphore, #tpu.memory_space<semaphore_mem>>)
    %c0_i32_42 = arith.constant 0 : i32
    %55 = arith.addi %0, %c0_i32_42 : i32
    %c6_i32 = arith.constant 6 : i32
    %56 = arith.addi %55, %c6_i32 : i32
    %57 = arith.index_cast %56 : i32 to index
    %58 = memref.load %arg1[%57] : memref<16xi32, #tpu.memory_space<smem>>
    %c0_i32_43 = arith.constant 0 : i32
    %c0_i32_44 = arith.constant 0 : i32
    %c6_i32_45 = arith.constant 6 : i32
    %c0_i32_46 = arith.constant 0 : i32
    %59 = tpu.memref_slice %arg2[%58, %c0_i32_46] : memref<64x128xf32, #tpu.memory_space<any>> -> memref<1x128xf32, #tpu.memory_space<any>>
    %c6_i32_47 = arith.constant 6 : i32
    %c0_i32_48 = arith.constant 0 : i32
    %60 = tpu.memref_slice %arg4[%c0_i32_43, %c6_i32_47, %c0_i32_48] : memref<2x16x128xf32, #tpu.memory_space<vmem>> -> memref<1x1x128xf32, #tpu.memory_space<vmem>>
    %61 = tpu.memref_squeeze %60 : memref<1x1x128xf32, #tpu.memory_space<vmem>> -> memref<1x128xf32, #tpu.memory_space<vmem>>
    %62 = tpu.memref_slice %arg5[%c0_i32_44, %c6_i32_45] : memref<2x16x!tpu.dma_semaphore, #tpu.memory_space<semaphore_mem>> -> memref<1x1x!tpu.dma_semaphore, #tpu.memory_space<semaphore_mem>>
    %63 = tpu.memref_squeeze %62 : memref<1x1x!tpu.dma_semaphore, #tpu.memory_space<semaphore_mem>> -> memref<!tpu.dma_semaphore, #tpu.memory_space<semaphore_mem>>
    tpu.enqueue_dma source(%59 : memref<1x128xf32, #tpu.memory_space<any>>) target(%61 : memref<1x128xf32, #tpu.memory_space<vmem>>) target_semaphore(%63 : memref<!tpu.dma_semaphore, #tpu.memory_space<semaphore_mem>>)
    %c0_i32_49 = arith.constant 0 : i32
    %64 = arith.addi %0, %c0_i32_49 : i32
    %c7_i32 = arith.constant 7 : i32
    %65 = arith.addi %64, %c7_i32 : i32
    %66 = arith.index_cast %65 : i32 to index
    %67 = memref.load %arg1[%66] : memref<16xi32, #tpu.memory_space<smem>>
    %c0_i32_50 = arith.constant 0 : i32
    %c0_i32_51 = arith.constant 0 : i32
    %c7_i32_52 = arith.constant 7 : i32
    %c0_i32_53 = arith.constant 0 : i32
    %68 = tpu.memref_slice %arg2[%67, %c0_i32_53] : memref<64x128xf32, #tpu.memory_space<any>> -> memref<1x128xf32, #tpu.memory_space<any>>
    %c7_i32_54 = arith.constant 7 : i32
    %c0_i32_55 = arith.constant 0 : i32
    %69 = tpu.memref_slice %arg4[%c0_i32_50, %c7_i32_54, %c0_i32_55] : memref<2x16x128xf32, #tpu.memory_space<vmem>> -> memref<1x1x128xf32, #tpu.memory_space<vmem>>
    %70 = tpu.memref_squeeze %69 : memref<1x1x128xf32, #tpu.memory_space<vmem>> -> memref<1x128xf32, #tpu.memory_space<vmem>>
    %71 = tpu.memref_slice %arg5[%c0_i32_51, %c7_i32_52] : memref<2x16x!tpu.dma_semaphore, #tpu.memory_space<semaphore_mem>> -> memref<1x1x!tpu.dma_semaphore, #tpu.memory_space<semaphore_mem>>
    %72 = tpu.memref_squeeze %71 : memref<1x1x!tpu.dma_semaphore, #tpu.memory_space<semaphore_mem>> -> memref<!tpu.dma_semaphore, #tpu.memory_space<semaphore_mem>>
    tpu.enqueue_dma source(%68 : memref<1x128xf32, #tpu.memory_space<any>>) target(%70 : memref<1x128xf32, #tpu.memory_space<vmem>>) target_semaphore(%72 : memref<!tpu.dma_semaphore, #tpu.memory_space<semaphore_mem>>)
    %c0_i32_56 = arith.constant 0 : i32
    %73 = arith.addi %0, %c0_i32_56 : i32
    %c8_i32 = arith.constant 8 : i32
    %74 = arith.addi %73, %c8_i32 : i32
    %75 = arith.index_cast %74 : i32 to index
    %76 = memref.load %arg1[%75] : memref<16xi32, #tpu.memory_space<smem>>
    %c0_i32_57 = arith.constant 0 : i32
    %c0_i32_58 = arith.constant 0 : i32
    %c8_i32_59 = arith.constant 8 : i32
    %c0_i32_60 = arith.constant 0 : i32
    %77 = tpu.memref_slice %arg2[%76, %c0_i32_60] : memref<64x128xf32, #tpu.memory_space<any>> -> memref<1x128xf32, #tpu.memory_space<any>>
    %c8_i32_61 = arith.constant 8 : i32
    %c0_i32_62 = arith.constant 0 : i32
    %78 = tpu.memref_slice %arg4[%c0_i32_57, %c8_i32_61, %c0_i32_62] : memref<2x16x128xf32, #tpu.memory_space<vmem>> -> memref<1x1x128xf32, #tpu.memory_space<vmem>>
    %79 = tpu.memref_squeeze %78 : memref<1x1x128xf32, #tpu.memory_space<vmem>> -> memref<1x128xf32, #tpu.memory_space<vmem>>
    %80 = tpu.memref_slice %arg5[%c0_i32_58, %c8_i32_59] : memref<2x16x!tpu.dma_semaphore, #tpu.memory_space<semaphore_mem>> -> memref<1x1x!tpu.dma_semaphore, #tpu.memory_space<semaphore_mem>>
    %81 = tpu.memref_squeeze %80 : memref<1x1x!tpu.dma_semaphore, #tpu.memory_space<semaphore_mem>> -> memref<!tpu.dma_semaphore, #tpu.memory_space<semaphore_mem>>
    tpu.enqueue_dma source(%77 : memref<1x128xf32, #tpu.memory_space<any>>) target(%79 : memref<1x128xf32, #tpu.memory_space<vmem>>) target_semaphore(%81 : memref<!tpu.dma_semaphore, #tpu.memory_space<semaphore_mem>>)
    %c0_i32_63 = arith.constant 0 : i32
    %82 = arith.addi %0, %c0_i32_63 : i32
    %c9_i32 = arith.constant 9 : i32
    %83 = arith.addi %82, %c9_i32 : i32
    %84 = arith.index_cast %83 : i32 to index
    %85 = memref.load %arg1[%84] : memref<16xi32, #tpu.memory_space<smem>>
    %c0_i32_64 = arith.constant 0 : i32
    %c0_i32_65 = arith.constant 0 : i32
    %c9_i32_66 = arith.constant 9 : i32
    %c0_i32_67 = arith.constant 0 : i32
    %86 = tpu.memref_slice %arg2[%85, %c0_i32_67] : memref<64x128xf32, #tpu.memory_space<any>> -> memref<1x128xf32, #tpu.memory_space<any>>
    %c9_i32_68 = arith.constant 9 : i32
    %c0_i32_69 = arith.constant 0 : i32
    %87 = tpu.memref_slice %arg4[%c0_i32_64, %c9_i32_68, %c0_i32_69] : memref<2x16x128xf32, #tpu.memory_space<vmem>> -> memref<1x1x128xf32, #tpu.memory_space<vmem>>
    %88 = tpu.memref_squeeze %87 : memref<1x1x128xf32, #tpu.memory_space<vmem>> -> memref<1x128xf32, #tpu.memory_space<vmem>>
    %89 = tpu.memref_slice %arg5[%c0_i32_65, %c9_i32_66] : memref<2x16x!tpu.dma_semaphore, #tpu.memory_space<semaphore_mem>> -> memref<1x1x!tpu.dma_semaphore, #tpu.memory_space<semaphore_mem>>
    %90 = tpu.memref_squeeze %89 : memref<1x1x!tpu.dma_semaphore, #tpu.memory_space<semaphore_mem>> -> memref<!tpu.dma_semaphore, #tpu.memory_space<semaphore_mem>>
    tpu.enqueue_dma source(%86 : memref<1x128xf32, #tpu.memory_space<any>>) target(%88 : memref<1x128xf32, #tpu.memory_space<vmem>>) target_semaphore(%90 : memref<!tpu.dma_semaphore, #tpu.memory_space<semaphore_mem>>)
    %c0_i32_70 = arith.constant 0 : i32
    %91 = arith.addi %0, %c0_i32_70 : i32
    %c10_i32 = arith.constant 10 : i32
    %92 = arith.addi %91, %c10_i32 : i32
    %93 = arith.index_cast %92 : i32 to index
    %94 = memref.load %arg1[%93] : memref<16xi32, #tpu.memory_space<smem>>
    %c0_i32_71 = arith.constant 0 : i32
    %c0_i32_72 = arith.constant 0 : i32
    %c10_i32_73 = arith.constant 10 : i32
    %c0_i32_74 = arith.constant 0 : i32
    %95 = tpu.memref_slice %arg2[%94, %c0_i32_74] : memref<64x128xf32, #tpu.memory_space<any>> -> memref<1x128xf32, #tpu.memory_space<any>>
    %c10_i32_75 = arith.constant 10 : i32
    %c0_i32_76 = arith.constant 0 : i32
    %96 = tpu.memref_slice %arg4[%c0_i32_71, %c10_i32_75, %c0_i32_76] : memref<2x16x128xf32, #tpu.memory_space<vmem>> -> memref<1x1x128xf32, #tpu.memory_space<vmem>>
    %97 = tpu.memref_squeeze %96 : memref<1x1x128xf32, #tpu.memory_space<vmem>> -> memref<1x128xf32, #tpu.memory_space<vmem>>
    %98 = tpu.memref_slice %arg5[%c0_i32_72, %c10_i32_73] : memref<2x16x!tpu.dma_semaphore, #tpu.memory_space<semaphore_mem>> -> memref<1x1x!tpu.dma_semaphore, #tpu.memory_space<semaphore_mem>>
    %99 = tpu.memref_squeeze %98 : memref<1x1x!tpu.dma_semaphore, #tpu.memory_space<semaphore_mem>> -> memref<!tpu.dma_semaphore, #tpu.memory_space<semaphore_mem>>
    tpu.enqueue_dma source(%95 : memref<1x128xf32, #tpu.memory_space<any>>) target(%97 : memref<1x128xf32, #tpu.memory_space<vmem>>) target_semaphore(%99 : memref<!tpu.dma_semaphore, #tpu.memory_space<semaphore_mem>>)
    %c0_i32_77 = arith.constant 0 : i32
    %100 = arith.addi %0, %c0_i32_77 : i32
    %c11_i32 = arith.constant 11 : i32
    %101 = arith.addi %100, %c11_i32 : i32
    %102 = arith.index_cast %101 : i32 to index
    %103 = memref.load %arg1[%102] : memref<16xi32, #tpu.memory_space<smem>>
    %c0_i32_78 = arith.constant 0 : i32
    %c0_i32_79 = arith.constant 0 : i32
    %c11_i32_80 = arith.constant 11 : i32
    %c0_i32_81 = arith.constant 0 : i32
    %104 = tpu.memref_slice %arg2[%103, %c0_i32_81] : memref<64x128xf32, #tpu.memory_space<any>> -> memref<1x128xf32, #tpu.memory_space<any>>
    %c11_i32_82 = arith.constant 11 : i32
    %c0_i32_83 = arith.constant 0 : i32
    %105 = tpu.memref_slice %arg4[%c0_i32_78, %c11_i32_82, %c0_i32_83] : memref<2x16x128xf32, #tpu.memory_space<vmem>> -> memref<1x1x128xf32, #tpu.memory_space<vmem>>
    %106 = tpu.memref_squeeze %105 : memref<1x1x128xf32, #tpu.memory_space<vmem>> -> memref<1x128xf32, #tpu.memory_space<vmem>>
    %107 = tpu.memref_slice %arg5[%c0_i32_79, %c11_i32_80] : memref<2x16x!tpu.dma_semaphore, #tpu.memory_space<semaphore_mem>> -> memref<1x1x!tpu.dma_semaphore, #tpu.memory_space<semaphore_mem>>
    %108 = tpu.memref_squeeze %107 : memref<1x1x!tpu.dma_semaphore, #tpu.memory_space<semaphore_mem>> -> memref<!tpu.dma_semaphore, #tpu.memory_space<semaphore_mem>>
    tpu.enqueue_dma source(%104 : memref<1x128xf32, #tpu.memory_space<any>>) target(%106 : memref<1x128xf32, #tpu.memory_space<vmem>>) target_semaphore(%108 : memref<!tpu.dma_semaphore, #tpu.memory_space<semaphore_mem>>)
    %c0_i32_84 = arith.constant 0 : i32
    %109 = arith.addi %0, %c0_i32_84 : i32
    %c12_i32 = arith.constant 12 : i32
    %110 = arith.addi %109, %c12_i32 : i32
    %111 = arith.index_cast %110 : i32 to index
    %112 = memref.load %arg1[%111] : memref<16xi32, #tpu.memory_space<smem>>
    %c0_i32_85 = arith.constant 0 : i32
    %c0_i32_86 = arith.constant 0 : i32
    %c12_i32_87 = arith.constant 12 : i32
    %c0_i32_88 = arith.constant 0 : i32
    %113 = tpu.memref_slice %arg2[%112, %c0_i32_88] : memref<64x128xf32, #tpu.memory_space<any>> -> memref<1x128xf32, #tpu.memory_space<any>>
    %c12_i32_89 = arith.constant 12 : i32
    %c0_i32_90 = arith.constant 0 : i32
    %114 = tpu.memref_slice %arg4[%c0_i32_85, %c12_i32_89, %c0_i32_90] : memref<2x16x128xf32, #tpu.memory_space<vmem>> -> memref<1x1x128xf32, #tpu.memory_space<vmem>>
    %115 = tpu.memref_squeeze %114 : memref<1x1x128xf32, #tpu.memory_space<vmem>> -> memref<1x128xf32, #tpu.memory_space<vmem>>
    %116 = tpu.memref_slice %arg5[%c0_i32_86, %c12_i32_87] : memref<2x16x!tpu.dma_semaphore, #tpu.memory_space<semaphore_mem>> -> memref<1x1x!tpu.dma_semaphore, #tpu.memory_space<semaphore_mem>>
    %117 = tpu.memref_squeeze %116 : memref<1x1x!tpu.dma_semaphore, #tpu.memory_space<semaphore_mem>> -> memref<!tpu.dma_semaphore, #tpu.memory_space<semaphore_mem>>
    tpu.enqueue_dma source(%113 : memref<1x128xf32, #tpu.memory_space<any>>) target(%115 : memref<1x128xf32, #tpu.memory_space<vmem>>) target_semaphore(%117 : memref<!tpu.dma_semaphore, #tpu.memory_space<semaphore_mem>>)
    %c0_i32_91 = arith.constant 0 : i32
    %118 = arith.addi %0, %c0_i32_91 : i32
    %c13_i32 = arith.constant 13 : i32
    %119 = arith.addi %118, %c13_i32 : i32
    %120 = arith.index_cast %119 : i32 to index
    %121 = memref.load %arg1[%120] : memref<16xi32, #tpu.memory_space<smem>>
    %c0_i32_92 = arith.constant 0 : i32
    %c0_i32_93 = arith.constant 0 : i32
    %c13_i32_94 = arith.constant 13 : i32
    %c0_i32_95 = arith.constant 0 : i32
    %122 = tpu.memref_slice %arg2[%121, %c0_i32_95] : memref<64x128xf32, #tpu.memory_space<any>> -> memref<1x128xf32, #tpu.memory_space<any>>
    %c13_i32_96 = arith.constant 13 : i32
    %c0_i32_97 = arith.constant 0 : i32
    %123 = tpu.memref_slice %arg4[%c0_i32_92, %c13_i32_96, %c0_i32_97] : memref<2x16x128xf32, #tpu.memory_space<vmem>> -> memref<1x1x128xf32, #tpu.memory_space<vmem>>
    %124 = tpu.memref_squeeze %123 : memref<1x1x128xf32, #tpu.memory_space<vmem>> -> memref<1x128xf32, #tpu.memory_space<vmem>>
    %125 = tpu.memref_slice %arg5[%c0_i32_93, %c13_i32_94] : memref<2x16x!tpu.dma_semaphore, #tpu.memory_space<semaphore_mem>> -> memref<1x1x!tpu.dma_semaphore, #tpu.memory_space<semaphore_mem>>
    %126 = tpu.memref_squeeze %125 : memref<1x1x!tpu.dma_semaphore, #tpu.memory_space<semaphore_mem>> -> memref<!tpu.dma_semaphore, #tpu.memory_space<semaphore_mem>>
    tpu.enqueue_dma source(%122 : memref<1x128xf32, #tpu.memory_space<any>>) target(%124 : memref<1x128xf32, #tpu.memory_space<vmem>>) target_semaphore(%126 : memref<!tpu.dma_semaphore, #tpu.memory_space<semaphore_mem>>)
    %c0_i32_98 = arith.constant 0 : i32
    %127 = arith.addi %0, %c0_i32_98 : i32
    %c14_i32 = arith.constant 14 : i32
    %128 = arith.addi %127, %c14_i32 : i32
    %129 = arith.index_cast %128 : i32 to index
    %130 = memref.load %arg1[%129] : memref<16xi32, #tpu.memory_space<smem>>
    %c0_i32_99 = arith.constant 0 : i32
    %c0_i32_100 = arith.constant 0 : i32
    %c14_i32_101 = arith.constant 14 : i32
    %c0_i32_102 = arith.constant 0 : i32
    %131 = tpu.memref_slice %arg2[%130, %c0_i32_102] : memref<64x128xf32, #tpu.memory_space<any>> -> memref<1x128xf32, #tpu.memory_space<any>>
    %c14_i32_103 = arith.constant 14 : i32
    %c0_i32_104 = arith.constant 0 : i32
    %132 = tpu.memref_slice %arg4[%c0_i32_99, %c14_i32_103, %c0_i32_104] : memref<2x16x128xf32, #tpu.memory_space<vmem>> -> memref<1x1x128xf32, #tpu.memory_space<vmem>>
    %133 = tpu.memref_squeeze %132 : memref<1x1x128xf32, #tpu.memory_space<vmem>> -> memref<1x128xf32, #tpu.memory_space<vmem>>
    %134 = tpu.memref_slice %arg5[%c0_i32_100, %c14_i32_101] : memref<2x16x!tpu.dma_semaphore, #tpu.memory_space<semaphore_mem>> -> memref<1x1x!tpu.dma_semaphore, #tpu.memory_space<semaphore_mem>>
    %135 = tpu.memref_squeeze %134 : memref<1x1x!tpu.dma_semaphore, #tpu.memory_space<semaphore_mem>> -> memref<!tpu.dma_semaphore, #tpu.memory_space<semaphore_mem>>
    tpu.enqueue_dma source(%131 : memref<1x128xf32, #tpu.memory_space<any>>) target(%133 : memref<1x128xf32, #tpu.memory_space<vmem>>) target_semaphore(%135 : memref<!tpu.dma_semaphore, #tpu.memory_space<semaphore_mem>>)
    %c0_i32_105 = arith.constant 0 : i32
    %136 = arith.addi %0, %c0_i32_105 : i32
    %c15_i32 = arith.constant 15 : i32
    %137 = arith.addi %136, %c15_i32 : i32
    %138 = arith.index_cast %137 : i32 to index
    %139 = memref.load %arg1[%138] : memref<16xi32, #tpu.memory_space<smem>>
    %c0_i32_106 = arith.constant 0 : i32
    %c0_i32_107 = arith.constant 0 : i32
    %c15_i32_108 = arith.constant 15 : i32
    %c0_i32_109 = arith.constant 0 : i32
    %140 = tpu.memref_slice %arg2[%139, %c0_i32_109] : memref<64x128xf32, #tpu.memory_space<any>> -> memref<1x128xf32, #tpu.memory_space<any>>
    %c15_i32_110 = arith.constant 15 : i32
    %c0_i32_111 = arith.constant 0 : i32
    %141 = tpu.memref_slice %arg4[%c0_i32_106, %c15_i32_110, %c0_i32_111] : memref<2x16x128xf32, #tpu.memory_space<vmem>> -> memref<1x1x128xf32, #tpu.memory_space<vmem>>
    %142 = tpu.memref_squeeze %141 : memref<1x1x128xf32, #tpu.memory_space<vmem>> -> memref<1x128xf32, #tpu.memory_space<vmem>>
    %143 = tpu.memref_slice %arg5[%c0_i32_107, %c15_i32_108] : memref<2x16x!tpu.dma_semaphore, #tpu.memory_space<semaphore_mem>> -> memref<1x1x!tpu.dma_semaphore, #tpu.memory_space<semaphore_mem>>
    %144 = tpu.memref_squeeze %143 : memref<1x1x!tpu.dma_semaphore, #tpu.memory_space<semaphore_mem>> -> memref<!tpu.dma_semaphore, #tpu.memory_space<semaphore_mem>>
    tpu.enqueue_dma source(%140 : memref<1x128xf32, #tpu.memory_space<any>>) target(%142 : memref<1x128xf32, #tpu.memory_space<vmem>>) target_semaphore(%144 : memref<!tpu.dma_semaphore, #tpu.memory_space<semaphore_mem>>)
    %c0_i32_112 = arith.constant 0 : i32
    %c0_i32_113 = arith.constant 0 : i32
    %c0_i32_114 = arith.constant 0 : i32
    %c0_i32_115 = arith.constant 0 : i32
    %c0_i32_116 = arith.constant 0 : i32
    %145 = tpu.memref_slice %arg2[%c0_i32_115, %c0_i32_116] : memref<64x128xf32, #tpu.memory_space<any>> -> memref<1x128xf32, #tpu.memory_space<any>>
    %c0_i32_117 = arith.constant 0 : i32
    %c0_i32_118 = arith.constant 0 : i32
    %146 = tpu.memref_slice %arg4[%c0_i32_112, %c0_i32_117, %c0_i32_118] : memref<2x16x128xf32, #tpu.memory_space<vmem>> -> memref<1x1x128xf32, #tpu.memory_space<vmem>>
    %147 = tpu.memref_squeeze %146 : memref<1x1x128xf32, #tpu.memory_space<vmem>> -> memref<1x128xf32, #tpu.memory_space<vmem>>
    %148 = tpu.memref_slice %arg5[%c0_i32_113, %c0_i32_114] : memref<2x16x!tpu.dma_semaphore, #tpu.memory_space<semaphore_mem>> -> memref<1x1x!tpu.dma_semaphore, #tpu.memory_space<semaphore_mem>>
    %149 = tpu.memref_squeeze %148 : memref<1x1x!tpu.dma_semaphore, #tpu.memory_space<semaphore_mem>> -> memref<!tpu.dma_semaphore, #tpu.memory_space<semaphore_mem>>
    tpu.wait_dma2 semaphore(%149 : memref<!tpu.dma_semaphore, #tpu.memory_space<semaphore_mem>>) src(%145 : memref<1x128xf32, #tpu.memory_space<any>>) dst(%147 : memref<1x128xf32, #tpu.memory_space<vmem>>)
    %c0_i32_119 = arith.constant 0 : i32
    %c0_i32_120 = arith.constant 0 : i32
    %c1_i32_121 = arith.constant 1 : i32
    %c0_i32_122 = arith.constant 0 : i32
    %c0_i32_123 = arith.constant 0 : i32
    %150 = tpu.memref_slice %arg2[%c0_i32_122, %c0_i32_123] : memref<64x128xf32, #tpu.memory_space<any>> -> memref<1x128xf32, #tpu.memory_space<any>>
    %c1_i32_124 = arith.constant 1 : i32
    %c0_i32_125 = arith.constant 0 : i32
    %151 = tpu.memref_slice %arg4[%c0_i32_119, %c1_i32_124, %c0_i32_125] : memref<2x16x128xf32, #tpu.memory_space<vmem>> -> memref<1x1x128xf32, #tpu.memory_space<vmem>>
    %152 = tpu.memref_squeeze %151 : memref<1x1x128xf32, #tpu.memory_space<vmem>> -> memref<1x128xf32, #tpu.memory_space<vmem>>
    %153 = tpu.memref_slice %arg5[%c0_i32_120, %c1_i32_121] : memref<2x16x!tpu.dma_semaphore, #tpu.memory_space<semaphore_mem>> -> memref<1x1x!tpu.dma_semaphore, #tpu.memory_space<semaphore_mem>>
    %154 = tpu.memref_squeeze %153 : memref<1x1x!tpu.dma_semaphore, #tpu.memory_space<semaphore_mem>> -> memref<!tpu.dma_semaphore, #tpu.memory_space<semaphore_mem>>
    tpu.wait_dma2 semaphore(%154 : memref<!tpu.dma_semaphore, #tpu.memory_space<semaphore_mem>>) src(%150 : memref<1x128xf32, #tpu.memory_space<any>>) dst(%152 : memref<1x128xf32, #tpu.memory_space<vmem>>)
    %c0_i32_126 = arith.constant 0 : i32
    %c0_i32_127 = arith.constant 0 : i32
    %c2_i32_128 = arith.constant 2 : i32
    %c0_i32_129 = arith.constant 0 : i32
    %c0_i32_130 = arith.constant 0 : i32
    %155 = tpu.memref_slice %arg2[%c0_i32_129, %c0_i32_130] : memref<64x128xf32, #tpu.memory_space<any>> -> memref<1x128xf32, #tpu.memory_space<any>>
    %c2_i32_131 = arith.constant 2 : i32
    %c0_i32_132 = arith.constant 0 : i32
    %156 = tpu.memref_slice %arg4[%c0_i32_126, %c2_i32_131, %c0_i32_132] : memref<2x16x128xf32, #tpu.memory_space<vmem>> -> memref<1x1x128xf32, #tpu.memory_space<vmem>>
    %157 = tpu.memref_squeeze %156 : memref<1x1x128xf32, #tpu.memory_space<vmem>> -> memref<1x128xf32, #tpu.memory_space<vmem>>
    %158 = tpu.memref_slice %arg5[%c0_i32_127, %c2_i32_128] : memref<2x16x!tpu.dma_semaphore, #tpu.memory_space<semaphore_mem>> -> memref<1x1x!tpu.dma_semaphore, #tpu.memory_space<semaphore_mem>>
    %159 = tpu.memref_squeeze %158 : memref<1x1x!tpu.dma_semaphore, #tpu.memory_space<semaphore_mem>> -> memref<!tpu.dma_semaphore, #tpu.memory_space<semaphore_mem>>
    tpu.wait_dma2 semaphore(%159 : memref<!tpu.dma_semaphore, #tpu.memory_space<semaphore_mem>>) src(%155 : memref<1x128xf32, #tpu.memory_space<any>>) dst(%157 : memref<1x128xf32, #tpu.memory_space<vmem>>)
    %c0_i32_133 = arith.constant 0 : i32
    %c0_i32_134 = arith.constant 0 : i32
    %c3_i32_135 = arith.constant 3 : i32
    %c0_i32_136 = arith.constant 0 : i32
    %c0_i32_137 = arith.constant 0 : i32
    %160 = tpu.memref_slice %arg2[%c0_i32_136, %c0_i32_137] : memref<64x128xf32, #tpu.memory_space<any>> -> memref<1x128xf32, #tpu.memory_space<any>>
    %c3_i32_138 = arith.constant 3 : i32
    %c0_i32_139 = arith.constant 0 : i32
    %161 = tpu.memref_slice %arg4[%c0_i32_133, %c3_i32_138, %c0_i32_139] : memref<2x16x128xf32, #tpu.memory_space<vmem>> -> memref<1x1x128xf32, #tpu.memory_space<vmem>>
    %162 = tpu.memref_squeeze %161 : memref<1x1x128xf32, #tpu.memory_space<vmem>> -> memref<1x128xf32, #tpu.memory_space<vmem>>
    %163 = tpu.memref_slice %arg5[%c0_i32_134, %c3_i32_135] : memref<2x16x!tpu.dma_semaphore, #tpu.memory_space<semaphore_mem>> -> memref<1x1x!tpu.dma_semaphore, #tpu.memory_space<semaphore_mem>>
    %164 = tpu.memref_squeeze %163 : memref<1x1x!tpu.dma_semaphore, #tpu.memory_space<semaphore_mem>> -> memref<!tpu.dma_semaphore, #tpu.memory_space<semaphore_mem>>
    tpu.wait_dma2 semaphore(%164 : memref<!tpu.dma_semaphore, #tpu.memory_space<semaphore_mem>>) src(%160 : memref<1x128xf32, #tpu.memory_space<any>>) dst(%162 : memref<1x128xf32, #tpu.memory_space<vmem>>)
    %c0_i32_140 = arith.constant 0 : i32
    %c0_i32_141 = arith.constant 0 : i32
    %c4_i32_142 = arith.constant 4 : i32
    %c0_i32_143 = arith.constant 0 : i32
    %c0_i32_144 = arith.constant 0 : i32
    %165 = tpu.memref_slice %arg2[%c0_i32_143, %c0_i32_144] : memref<64x128xf32, #tpu.memory_space<any>> -> memref<1x128xf32, #tpu.memory_space<any>>
    %c4_i32_145 = arith.constant 4 : i32
    %c0_i32_146 = arith.constant 0 : i32
    %166 = tpu.memref_slice %arg4[%c0_i32_140, %c4_i32_145, %c0_i32_146] : memref<2x16x128xf32, #tpu.memory_space<vmem>> -> memref<1x1x128xf32, #tpu.memory_space<vmem>>
    %167 = tpu.memref_squeeze %166 : memref<1x1x128xf32, #tpu.memory_space<vmem>> -> memref<1x128xf32, #tpu.memory_space<vmem>>
    %168 = tpu.memref_slice %arg5[%c0_i32_141, %c4_i32_142] : memref<2x16x!tpu.dma_semaphore, #tpu.memory_space<semaphore_mem>> -> memref<1x1x!tpu.dma_semaphore, #tpu.memory_space<semaphore_mem>>
    %169 = tpu.memref_squeeze %168 : memref<1x1x!tpu.dma_semaphore, #tpu.memory_space<semaphore_mem>> -> memref<!tpu.dma_semaphore, #tpu.memory_space<semaphore_mem>>
    tpu.wait_dma2 semaphore(%169 : memref<!tpu.dma_semaphore, #tpu.memory_space<semaphore_mem>>) src(%165 : memref<1x128xf32, #tpu.memory_space<any>>) dst(%167 : memref<1x128xf32, #tpu.memory_space<vmem>>)
    %c0_i32_147 = arith.constant 0 : i32
    %c0_i32_148 = arith.constant 0 : i32
    %c5_i32_149 = arith.constant 5 : i32
    %c0_i32_150 = arith.constant 0 : i32
    %c0_i32_151 = arith.constant 0 : i32
    %170 = tpu.memref_slice %arg2[%c0_i32_150, %c0_i32_151] : memref<64x128xf32, #tpu.memory_space<any>> -> memref<1x128xf32, #tpu.memory_space<any>>
    %c5_i32_152 = arith.constant 5 : i32
    %c0_i32_153 = arith.constant 0 : i32
    %171 = tpu.memref_slice %arg4[%c0_i32_147, %c5_i32_152, %c0_i32_153] : memref<2x16x128xf32, #tpu.memory_space<vmem>> -> memref<1x1x128xf32, #tpu.memory_space<vmem>>
    %172 = tpu.memref_squeeze %171 : memref<1x1x128xf32, #tpu.memory_space<vmem>> -> memref<1x128xf32, #tpu.memory_space<vmem>>
    %173 = tpu.memref_slice %arg5[%c0_i32_148, %c5_i32_149] : memref<2x16x!tpu.dma_semaphore, #tpu.memory_space<semaphore_mem>> -> memref<1x1x!tpu.dma_semaphore, #tpu.memory_space<semaphore_mem>>
    %174 = tpu.memref_squeeze %173 : memref<1x1x!tpu.dma_semaphore, #tpu.memory_space<semaphore_mem>> -> memref<!tpu.dma_semaphore, #tpu.memory_space<semaphore_mem>>
    tpu.wait_dma2 semaphore(%174 : memref<!tpu.dma_semaphore, #tpu.memory_space<semaphore_mem>>) src(%170 : memref<1x128xf32, #tpu.memory_space<any>>) dst(%172 : memref<1x128xf32, #tpu.memory_space<vmem>>)
    %c0_i32_154 = arith.constant 0 : i32
    %c0_i32_155 = arith.constant 0 : i32
    %c6_i32_156 = arith.constant 6 : i32
    %c0_i32_157 = arith.constant 0 : i32
    %c0_i32_158 = arith.constant 0 : i32
    %175 = tpu.memref_slice %arg2[%c0_i32_157, %c0_i32_158] : memref<64x128xf32, #tpu.memory_space<any>> -> memref<1x128xf32, #tpu.memory_space<any>>
    %c6_i32_159 = arith.constant 6 : i32
    %c0_i32_160 = arith.constant 0 : i32
    %176 = tpu.memref_slice %arg4[%c0_i32_154, %c6_i32_159, %c0_i32_160] : memref<2x16x128xf32, #tpu.memory_space<vmem>> -> memref<1x1x128xf32, #tpu.memory_space<vmem>>
    %177 = tpu.memref_squeeze %176 : memref<1x1x128xf32, #tpu.memory_space<vmem>> -> memref<1x128xf32, #tpu.memory_space<vmem>>
    %178 = tpu.memref_slice %arg5[%c0_i32_155, %c6_i32_156] : memref<2x16x!tpu.dma_semaphore, #tpu.memory_space<semaphore_mem>> -> memref<1x1x!tpu.dma_semaphore, #tpu.memory_space<semaphore_mem>>
    %179 = tpu.memref_squeeze %178 : memref<1x1x!tpu.dma_semaphore, #tpu.memory_space<semaphore_mem>> -> memref<!tpu.dma_semaphore, #tpu.memory_space<semaphore_mem>>
    tpu.wait_dma2 semaphore(%179 : memref<!tpu.dma_semaphore, #tpu.memory_space<semaphore_mem>>) src(%175 : memref<1x128xf32, #tpu.memory_space<any>>) dst(%177 : memref<1x128xf32, #tpu.memory_space<vmem>>)
    %c0_i32_161 = arith.constant 0 : i32
    %c0_i32_162 = arith.constant 0 : i32
    %c7_i32_163 = arith.constant 7 : i32
    %c0_i32_164 = arith.constant 0 : i32
    %c0_i32_165 = arith.constant 0 : i32
    %180 = tpu.memref_slice %arg2[%c0_i32_164, %c0_i32_165] : memref<64x128xf32, #tpu.memory_space<any>> -> memref<1x128xf32, #tpu.memory_space<any>>
    %c7_i32_166 = arith.constant 7 : i32
    %c0_i32_167 = arith.constant 0 : i32
    %181 = tpu.memref_slice %arg4[%c0_i32_161, %c7_i32_166, %c0_i32_167] : memref<2x16x128xf32, #tpu.memory_space<vmem>> -> memref<1x1x128xf32, #tpu.memory_space<vmem>>
    %182 = tpu.memref_squeeze %181 : memref<1x1x128xf32, #tpu.memory_space<vmem>> -> memref<1x128xf32, #tpu.memory_space<vmem>>
    %183 = tpu.memref_slice %arg5[%c0_i32_162, %c7_i32_163] : memref<2x16x!tpu.dma_semaphore, #tpu.memory_space<semaphore_mem>> -> memref<1x1x!tpu.dma_semaphore, #tpu.memory_space<semaphore_mem>>
    %184 = tpu.memref_squeeze %183 : memref<1x1x!tpu.dma_semaphore, #tpu.memory_space<semaphore_mem>> -> memref<!tpu.dma_semaphore, #tpu.memory_space<semaphore_mem>>
    tpu.wait_dma2 semaphore(%184 : memref<!tpu.dma_semaphore, #tpu.memory_space<semaphore_mem>>) src(%180 : memref<1x128xf32, #tpu.memory_space<any>>) dst(%182 : memref<1x128xf32, #tpu.memory_space<vmem>>)
    %c0_i32_168 = arith.constant 0 : i32
    %c0_i32_169 = arith.constant 0 : i32
    %c8_i32_170 = arith.constant 8 : i32
    %c0_i32_171 = arith.constant 0 : i32
    %c0_i32_172 = arith.constant 0 : i32
    %185 = tpu.memref_slice %arg2[%c0_i32_171, %c0_i32_172] : memref<64x128xf32, #tpu.memory_space<any>> -> memref<1x128xf32, #tpu.memory_space<any>>
    %c8_i32_173 = arith.constant 8 : i32
    %c0_i32_174 = arith.constant 0 : i32
    %186 = tpu.memref_slice %arg4[%c0_i32_168, %c8_i32_173, %c0_i32_174] : memref<2x16x128xf32, #tpu.memory_space<vmem>> -> memref<1x1x128xf32, #tpu.memory_space<vmem>>
    %187 = tpu.memref_squeeze %186 : memref<1x1x128xf32, #tpu.memory_space<vmem>> -> memref<1x128xf32, #tpu.memory_space<vmem>>
    %188 = tpu.memref_slice %arg5[%c0_i32_169, %c8_i32_170] : memref<2x16x!tpu.dma_semaphore, #tpu.memory_space<semaphore_mem>> -> memref<1x1x!tpu.dma_semaphore, #tpu.memory_space<semaphore_mem>>
    %189 = tpu.memref_squeeze %188 : memref<1x1x!tpu.dma_semaphore, #tpu.memory_space<semaphore_mem>> -> memref<!tpu.dma_semaphore, #tpu.memory_space<semaphore_mem>>
    tpu.wait_dma2 semaphore(%189 : memref<!tpu.dma_semaphore, #tpu.memory_space<semaphore_mem>>) src(%185 : memref<1x128xf32, #tpu.memory_space<any>>) dst(%187 : memref<1x128xf32, #tpu.memory_space<vmem>>)
    %c0_i32_175 = arith.constant 0 : i32
    %c0_i32_176 = arith.constant 0 : i32
    %c9_i32_177 = arith.constant 9 : i32
    %c0_i32_178 = arith.constant 0 : i32
    %c0_i32_179 = arith.constant 0 : i32
    %190 = tpu.memref_slice %arg2[%c0_i32_178, %c0_i32_179] : memref<64x128xf32, #tpu.memory_space<any>> -> memref<1x128xf32, #tpu.memory_space<any>>
    %c9_i32_180 = arith.constant 9 : i32
    %c0_i32_181 = arith.constant 0 : i32
    %191 = tpu.memref_slice %arg4[%c0_i32_175, %c9_i32_180, %c0_i32_181] : memref<2x16x128xf32, #tpu.memory_space<vmem>> -> memref<1x1x128xf32, #tpu.memory_space<vmem>>
    %192 = tpu.memref_squeeze %191 : memref<1x1x128xf32, #tpu.memory_space<vmem>> -> memref<1x128xf32, #tpu.memory_space<vmem>>
    %193 = tpu.memref_slice %arg5[%c0_i32_176, %c9_i32_177] : memref<2x16x!tpu.dma_semaphore, #tpu.memory_space<semaphore_mem>> -> memref<1x1x!tpu.dma_semaphore, #tpu.memory_space<semaphore_mem>>
    %194 = tpu.memref_squeeze %193 : memref<1x1x!tpu.dma_semaphore, #tpu.memory_space<semaphore_mem>> -> memref<!tpu.dma_semaphore, #tpu.memory_space<semaphore_mem>>
    tpu.wait_dma2 semaphore(%194 : memref<!tpu.dma_semaphore, #tpu.memory_space<semaphore_mem>>) src(%190 : memref<1x128xf32, #tpu.memory_space<any>>) dst(%192 : memref<1x128xf32, #tpu.memory_space<vmem>>)
    %c0_i32_182 = arith.constant 0 : i32
    %c0_i32_183 = arith.constant 0 : i32
    %c10_i32_184 = arith.constant 10 : i32
    %c0_i32_185 = arith.constant 0 : i32
    %c0_i32_186 = arith.constant 0 : i32
    %195 = tpu.memref_slice %arg2[%c0_i32_185, %c0_i32_186] : memref<64x128xf32, #tpu.memory_space<any>> -> memref<1x128xf32, #tpu.memory_space<any>>
    %c10_i32_187 = arith.constant 10 : i32
    %c0_i32_188 = arith.constant 0 : i32
    %196 = tpu.memref_slice %arg4[%c0_i32_182, %c10_i32_187, %c0_i32_188] : memref<2x16x128xf32, #tpu.memory_space<vmem>> -> memref<1x1x128xf32, #tpu.memory_space<vmem>>
    %197 = tpu.memref_squeeze %196 : memref<1x1x128xf32, #tpu.memory_space<vmem>> -> memref<1x128xf32, #tpu.memory_space<vmem>>
    %198 = tpu.memref_slice %arg5[%c0_i32_183, %c10_i32_184] : memref<2x16x!tpu.dma_semaphore, #tpu.memory_space<semaphore_mem>> -> memref<1x1x!tpu.dma_semaphore, #tpu.memory_space<semaphore_mem>>
    %199 = tpu.memref_squeeze %198 : memref<1x1x!tpu.dma_semaphore, #tpu.memory_space<semaphore_mem>> -> memref<!tpu.dma_semaphore, #tpu.memory_space<semaphore_mem>>
    tpu.wait_dma2 semaphore(%199 : memref<!tpu.dma_semaphore, #tpu.memory_space<semaphore_mem>>) src(%195 : memref<1x128xf32, #tpu.memory_space<any>>) dst(%197 : memref<1x128xf32, #tpu.memory_space<vmem>>)
    %c0_i32_189 = arith.constant 0 : i32
    %c0_i32_190 = arith.constant 0 : i32
    %c11_i32_191 = arith.constant 11 : i32
    %c0_i32_192 = arith.constant 0 : i32
    %c0_i32_193 = arith.constant 0 : i32
    %200 = tpu.memref_slice %arg2[%c0_i32_192, %c0_i32_193] : memref<64x128xf32, #tpu.memory_space<any>> -> memref<1x128xf32, #tpu.memory_space<any>>
    %c11_i32_194 = arith.constant 11 : i32
    %c0_i32_195 = arith.constant 0 : i32
    %201 = tpu.memref_slice %arg4[%c0_i32_189, %c11_i32_194, %c0_i32_195] : memref<2x16x128xf32, #tpu.memory_space<vmem>> -> memref<1x1x128xf32, #tpu.memory_space<vmem>>
    %202 = tpu.memref_squeeze %201 : memref<1x1x128xf32, #tpu.memory_space<vmem>> -> memref<1x128xf32, #tpu.memory_space<vmem>>
    %203 = tpu.memref_slice %arg5[%c0_i32_190, %c11_i32_191] : memref<2x16x!tpu.dma_semaphore, #tpu.memory_space<semaphore_mem>> -> memref<1x1x!tpu.dma_semaphore, #tpu.memory_space<semaphore_mem>>
    %204 = tpu.memref_squeeze %203 : memref<1x1x!tpu.dma_semaphore, #tpu.memory_space<semaphore_mem>> -> memref<!tpu.dma_semaphore, #tpu.memory_space<semaphore_mem>>
    tpu.wait_dma2 semaphore(%204 : memref<!tpu.dma_semaphore, #tpu.memory_space<semaphore_mem>>) src(%200 : memref<1x128xf32, #tpu.memory_space<any>>) dst(%202 : memref<1x128xf32, #tpu.memory_space<vmem>>)
    %c0_i32_196 = arith.constant 0 : i32
    %c0_i32_197 = arith.constant 0 : i32
    %c12_i32_198 = arith.constant 12 : i32
    %c0_i32_199 = arith.constant 0 : i32
    %c0_i32_200 = arith.constant 0 : i32
    %205 = tpu.memref_slice %arg2[%c0_i32_199, %c0_i32_200] : memref<64x128xf32, #tpu.memory_space<any>> -> memref<1x128xf32, #tpu.memory_space<any>>
    %c12_i32_201 = arith.constant 12 : i32
    %c0_i32_202 = arith.constant 0 : i32
    %206 = tpu.memref_slice %arg4[%c0_i32_196, %c12_i32_201, %c0_i32_202] : memref<2x16x128xf32, #tpu.memory_space<vmem>> -> memref<1x1x128xf32, #tpu.memory_space<vmem>>
    %207 = tpu.memref_squeeze %206 : memref<1x1x128xf32, #tpu.memory_space<vmem>> -> memref<1x128xf32, #tpu.memory_space<vmem>>
    %208 = tpu.memref_slice %arg5[%c0_i32_197, %c12_i32_198] : memref<2x16x!tpu.dma_semaphore, #tpu.memory_space<semaphore_mem>> -> memref<1x1x!tpu.dma_semaphore, #tpu.memory_space<semaphore_mem>>
    %209 = tpu.memref_squeeze %208 : memref<1x1x!tpu.dma_semaphore, #tpu.memory_space<semaphore_mem>> -> memref<!tpu.dma_semaphore, #tpu.memory_space<semaphore_mem>>
    tpu.wait_dma2 semaphore(%209 : memref<!tpu.dma_semaphore, #tpu.memory_space<semaphore_mem>>) src(%205 : memref<1x128xf32, #tpu.memory_space<any>>) dst(%207 : memref<1x128xf32, #tpu.memory_space<vmem>>)
    %c0_i32_203 = arith.constant 0 : i32
    %c0_i32_204 = arith.constant 0 : i32
    %c13_i32_205 = arith.constant 13 : i32
    %c0_i32_206 = arith.constant 0 : i32
    %c0_i32_207 = arith.constant 0 : i32
    %210 = tpu.memref_slice %arg2[%c0_i32_206, %c0_i32_207] : memref<64x128xf32, #tpu.memory_space<any>> -> memref<1x128xf32, #tpu.memory_space<any>>
    %c13_i32_208 = arith.constant 13 : i32
    %c0_i32_209 = arith.constant 0 : i32
    %211 = tpu.memref_slice %arg4[%c0_i32_203, %c13_i32_208, %c0_i32_209] : memref<2x16x128xf32, #tpu.memory_space<vmem>> -> memref<1x1x128xf32, #tpu.memory_space<vmem>>
    %212 = tpu.memref_squeeze %211 : memref<1x1x128xf32, #tpu.memory_space<vmem>> -> memref<1x128xf32, #tpu.memory_space<vmem>>
    %213 = tpu.memref_slice %arg5[%c0_i32_204, %c13_i32_205] : memref<2x16x!tpu.dma_semaphore, #tpu.memory_space<semaphore_mem>> -> memref<1x1x!tpu.dma_semaphore, #tpu.memory_space<semaphore_mem>>
    %214 = tpu.memref_squeeze %213 : memref<1x1x!tpu.dma_semaphore, #tpu.memory_space<semaphore_mem>> -> memref<!tpu.dma_semaphore, #tpu.memory_space<semaphore_mem>>
    tpu.wait_dma2 semaphore(%214 : memref<!tpu.dma_semaphore, #tpu.memory_space<semaphore_mem>>) src(%210 : memref<1x128xf32, #tpu.memory_space<any>>) dst(%212 : memref<1x128xf32, #tpu.memory_space<vmem>>)
    %c0_i32_210 = arith.constant 0 : i32
    %c0_i32_211 = arith.constant 0 : i32
    %c14_i32_212 = arith.constant 14 : i32
    %c0_i32_213 = arith.constant 0 : i32
    %c0_i32_214 = arith.constant 0 : i32
    %215 = tpu.memref_slice %arg2[%c0_i32_213, %c0_i32_214] : memref<64x128xf32, #tpu.memory_space<any>> -> memref<1x128xf32, #tpu.memory_space<any>>
    %c14_i32_215 = arith.constant 14 : i32
    %c0_i32_216 = arith.constant 0 : i32
    %216 = tpu.memref_slice %arg4[%c0_i32_210, %c14_i32_215, %c0_i32_216] : memref<2x16x128xf32, #tpu.memory_space<vmem>> -> memref<1x1x128xf32, #tpu.memory_space<vmem>>
    %217 = tpu.memref_squeeze %216 : memref<1x1x128xf32, #tpu.memory_space<vmem>> -> memref<1x128xf32, #tpu.memory_space<vmem>>
    %218 = tpu.memref_slice %arg5[%c0_i32_211, %c14_i32_212] : memref<2x16x!tpu.dma_semaphore, #tpu.memory_space<semaphore_mem>> -> memref<1x1x!tpu.dma_semaphore, #tpu.memory_space<semaphore_mem>>
    %219 = tpu.memref_squeeze %218 : memref<1x1x!tpu.dma_semaphore, #tpu.memory_space<semaphore_mem>> -> memref<!tpu.dma_semaphore, #tpu.memory_space<semaphore_mem>>
    tpu.wait_dma2 semaphore(%219 : memref<!tpu.dma_semaphore, #tpu.memory_space<semaphore_mem>>) src(%215 : memref<1x128xf32, #tpu.memory_space<any>>) dst(%217 : memref<1x128xf32, #tpu.memory_space<vmem>>)
    %c0_i32_217 = arith.constant 0 : i32
    %c0_i32_218 = arith.constant 0 : i32
    %c15_i32_219 = arith.constant 15 : i32
    %c0_i32_220 = arith.constant 0 : i32
    %c0_i32_221 = arith.constant 0 : i32
    %220 = tpu.memref_slice %arg2[%c0_i32_220, %c0_i32_221] : memref<64x128xf32, #tpu.memory_space<any>> -> memref<1x128xf32, #tpu.memory_space<any>>
    %c15_i32_222 = arith.constant 15 : i32
    %c0_i32_223 = arith.constant 0 : i32
    %221 = tpu.memref_slice %arg4[%c0_i32_217, %c15_i32_222, %c0_i32_223] : memref<2x16x128xf32, #tpu.memory_space<vmem>> -> memref<1x1x128xf32, #tpu.memory_space<vmem>>
    %222 = tpu.memref_squeeze %221 : memref<1x1x128xf32, #tpu.memory_space<vmem>> -> memref<1x128xf32, #tpu.memory_space<vmem>>
    %223 = tpu.memref_slice %arg5[%c0_i32_218, %c15_i32_219] : memref<2x16x!tpu.dma_semaphore, #tpu.memory_space<semaphore_mem>> -> memref<1x1x!tpu.dma_semaphore, #tpu.memory_space<semaphore_mem>>
    %224 = tpu.memref_squeeze %223 : memref<1x1x!tpu.dma_semaphore, #tpu.memory_space<semaphore_mem>> -> memref<!tpu.dma_semaphore, #tpu.memory_space<semaphore_mem>>
    tpu.wait_dma2 semaphore(%224 : memref<!tpu.dma_semaphore, #tpu.memory_space<semaphore_mem>>) src(%220 : memref<1x128xf32, #tpu.memory_space<any>>) dst(%222 : memref<1x128xf32, #tpu.memory_space<vmem>>)
    %c0 = arith.constant 0 : index
    %c0_224 = arith.constant 0 : index
    %c0_225 = arith.constant 0 : index
    %225 = vector.load %arg4[%c0, %c0_224, %c0_225] : memref<2x16x128xf32, #tpu.memory_space<vmem>>, vector<1x16x128xf32>
    %226 = vector.shape_cast %225 : vector<1x16x128xf32> to vector<16x128xf32>
    %cst = arith.constant 11.3137083 : f32
    %227 = vector.broadcast %cst : f32 to vector<16x128xf32>
    %228 = arith.mulf %226, %227 : vector<16x128xf32>
    %c0_226 = arith.constant 0 : index
    %c0_227 = arith.constant 0 : index
    %229 = vector.load %arg3[%c0_226, %c0_227] : memref<16x128xf32, #tpu.memory_space<vmem>>, vector<16x128xf32>
    tpu.vector_store %arg3[%c0_226, %c0_227], %228 {strides = array<i32>} : memref<16x128xf32, #tpu.memory_space<vmem>>, vector<16x128xf32>,
    return
  }
  func.func @transform_1(%arg0: i32, %arg1: memref<16xi32, #tpu.memory_space<smem>>) -> (i32, i32) {
    %c0_i32 = arith.constant 0 : i32
    %c0_i32_0 = arith.constant 0 : i32
    return %arg0, %c0_i32 : i32, i32
  }
}

</mosaic_0001>

<llo_original>
// kernel: tpu_custom_call.1
$region0: #{tpu_custom_call.1}
  #allocation0 [shape = 'u32[]', space=smem, size = 0x4, offset = 0x4, fixed_abs, tag = 'smem constant byte address 0x4 - core index']
  #allocation1 [shape = 'u32[144,128]{1,0:T(1,128)}', space=vmem, size = 0x12000, scoped, tag = 'internal scratch']
  #allocation2 [shape = 'f32[2,16,128]{2,1,0:T(8,128)}', space=vmem, size = 0x4000, scoped, tag = 'scratch operand']
  #allocation3 [shape = 's32[32]{0}', space=sflag, size = 0x80, scoped, tag = 'scratch operand']
  #allocation4 [shape = 's32[1]{0}', space=sflag, size = 0x4, scoped, tag = 'scoped memory for tpu_custom_call.1']
  #allocation5 [shape = 'u8[512]{0}', space=smem, size = 0x200, scoped, tag = 'prefetched SMEM operand 0']
  #allocation8 [shape = 's32[]', space=sflag, size = 0x4, offset = 0, fixed_abs, tag = 'sflag constant byte address 0x0 - dummy sync flag']
  #allocation9 [shape = 's32[]', space=sflag, size = 0x4, offset = 0, fixed_abs, tag = 'sflag constant byte address 0x0 - dummy sync flag']
  #allocation10 [shape = 'u32[]', space=smem, size = 0x4, offset = 0x44, fixed_abs, tag = 'smem constant byte address 0x44 - assertion arg 0']
  #allocation11 [shape = 'u32[]', space=smem, size = 0x4, offset = 0x48, fixed_abs, tag = 'smem constant byte address 0x48 - assertion arg 1']
  #allocation12 [shape = 's32[]', space=sflag, size = 0x4, offset = 0, fixed_abs, tag = 'sflag constant byte address 0x0 - dummy sync flag']
  #allocation13 [shape = 's32[]', space=sflag, size = 0x4, offset = 0, fixed_abs, tag = 'sflag constant byte address 0x0 - dummy sync flag']
  #allocation14 [shape = 's32[]', space=sflag, size = 0x4, offset = 0, fixed_abs, tag = 'sflag constant byte address 0x0 - dummy sync flag']
  #allocation15 [shape = 's32[]', space=sflag, size = 0x4, offset = 0, fixed_abs, tag = 'sflag constant byte address 0x0 - dummy sync flag']
  #allocation16 [shape = 's32[]', space=sflag, size = 0x4, offset = 0, fixed_abs, tag = 'sflag constant byte address 0x0 - dummy sync flag']
  #allocation17 [shape = 's32[]', space=sflag, size = 0x4, offset = 0, fixed_abs, tag = 'sflag constant byte address 0x0 - dummy sync flag']
  #allocation18 [shape = 's32[]', space=sflag, size = 0x4, offset = 0, fixed_abs, tag = 'sflag constant byte address 0x0 - dummy sync flag']
  #allocation19 [shape = 's32[]', space=sflag, size = 0x4, offset = 0, fixed_abs, tag = 'sflag constant byte address 0x0 - dummy sync flag']
  #allocation20 [shape = 's32[]', space=sflag, size = 0x4, offset = 0, fixed_abs, tag = 'sflag constant byte address 0x0 - dummy sync flag']
  #allocation21 [shape = 's32[]', space=sflag, size = 0x4, offset = 0, fixed_abs, tag = 'sflag constant byte address 0x0 - dummy sync flag']
  #allocation22 [shape = 's32[]', space=sflag, size = 0x4, offset = 0, fixed_abs, tag = 'sflag constant byte address 0x0 - dummy sync flag']
  #allocation23 [shape = 's32[]', space=sflag, size = 0x4, offset = 0, fixed_abs, tag = 'sflag constant byte address 0x0 - dummy sync flag']
  #allocation24 [shape = 's32[]', space=sflag, size = 0x4, offset = 0, fixed_abs, tag = 'sflag constant byte address 0x0 - dummy sync flag']
  #allocation25 [shape = 's32[]', space=sflag, size = 0x4, offset = 0, fixed_abs, tag = 'sflag constant byte address 0x0 - dummy sync flag']
  #allocation26 [shape = 's32[]', space=sflag, size = 0x4, offset = 0, fixed_abs, tag = 'sflag constant byte address 0x0 - dummy sync flag']
  #allocation27 [shape = 's32[]', space=sflag, size = 0x4, offset = 0, fixed_abs, tag = 'sflag constant byte address 0x0 - dummy sync flag']
  #allocation28 [shape = 's32[]', space=sflag, size = 0x4, offset = 0, fixed_abs, tag = 'sflag constant byte address 0x0 - dummy sync flag']
  #allocation29 [shape = 's32[]', space=sflag, size = 0x4, offset = 0, fixed_abs, tag = 'sflag constant byte address 0x0 - dummy sync flag']
  #allocation30 [shape = 's32[]', space=sflag, size = 0x4, offset = 0, fixed_abs, tag = 'sflag constant byte address 0x0 - dummy sync flag']
  #allocation31 [shape = 's32[]', space=sflag, size = 0x4, offset = 0, fixed_abs, tag = 'sflag constant byte address 0x0 - dummy sync flag']
  #allocation32 [shape = 's32[]', space=sflag, size = 0x4, offset = 0, fixed_abs, tag = 'sflag constant byte address 0x0 - dummy sync flag']
  #allocation33 [shape = 's32[]', space=sflag, size = 0x4, offset = 0, fixed_abs, tag = 'sflag constant byte address 0x0 - dummy sync flag']
  #allocation34 [shape = 's32[]', space=sflag, size = 0x4, offset = 0, fixed_abs, tag = 'sflag constant byte address 0x0 - dummy sync flag']
  #allocation35 [shape = 's32[]', space=sflag, size = 0x4, offset = 0, fixed_abs, tag = 'sflag constant byte address 0x0 - dummy sync flag']
  #allocation36 [shape = 's32[]', space=sflag, size = 0x4, offset = 0, fixed_abs, tag = 'sflag constant byte address 0x0 - dummy sync flag']
  #allocation37 [shape = 's32[]', space=sflag, size = 0x4, offset = 0, fixed_abs, tag = 'sflag constant byte address 0x0 - dummy sync flag']
  #allocation38 [shape = 's32[]', space=sflag, size = 0x4, offset = 0, fixed_abs, tag = 'sflag constant byte address 0x0 - dummy sync flag']
  #allocation39 [shape = 's32[]', space=sflag, size = 0x4, offset = 0, fixed_abs, tag = 'sflag constant byte address 0x0 - dummy sync flag']
  #allocation40 [shape = 's32[]', space=sflag, size = 0x4, offset = 0, fixed_abs, tag = 'sflag constant byte address 0x0 - dummy sync flag']
  #allocation41 [shape = 's32[]', space=sflag, size = 0x4, offset = 0, fixed_abs, tag = 'sflag constant byte address 0x0 - dummy sync flag']
  %s0 = inlined_call_operand.hbm [shape: s32[16], index: 0, kind: input, shape index: {}]
  %s1 = inlined_call_operand.hbm [shape: f32[64,128], index: 1, kind: input, shape index: {}]
  %s2 = inlined_call_operand.hbm [shape: f32[16,128], index: 2, kind: output, shape index: {}]
  %s3 = sld [smem:[#allocation0]]
  $region74: #{tpu_custom_call.1} parent=0
    _
  %s5 = ssub.s32 1, %s3
  %s6 = scalar_select 0, %s5, %s3
  %8 = dma.hbm_to_smem %s0, 16, [#allocation5], [#allocation4]
  %9 = dma.done [#allocation4], 16
  %10 = sfence
  $region1: #{tpu_custom_call.1} parent=0
    #allocation6 [shape = 'u8[8192]{0}', space=vmem, size = 0x2000, scoped, tag = 'output window, operand 0, single buffered']
    #allocation7 [shape = 's32[1]{0}', space=sflag, size = 0x4, scoped, tag = 'scoped memory for tpu_custom_call.1']
    %11 = vsyncpa [#allocation7], 0
    %s12 = smul.u32 0, 16
    %s13 = sld [smem:[#allocation5 + %s12]]
    %s14 = smul.addr %s13, 16
    %s15 = scalar_lea.hbm %s1, %s14
    // Predicated region
    $region2: #{tpu_custom_call.1} parent=1 // pred_check
      _
    $region3: #{tpu_custom_call.1} parent=1 // pred_check_branch
      %17 = sbr.rel target = $region5
    $region4: #{tpu_custom_call.1} parent=1 // pred_region
      %18 = sst [smem:[#allocation10]] [#allocation9]
      %19 = sst [smem:[#allocation11]] [#allocation8]
    $region5: #{tpu_custom_call.1} parent=1 // pred_fallthru
      _
    %21 = shalt.err (0)
    %s23 = sshll.u32 [#allocation2], 4
    %s24 = int_to_ptr.vmem [resolvable:$true] %s23
    %26 = dma.hbm_to_vmem [thread:$0]  %s15, 16, %s24, [#allocation3]
    %s27 = sadd.s32 %s12, 1
    %s28 = sld [smem:[#allocation5 + %s27]]
    %s29 = smul.addr %s28, 16
    %s30 = scalar_lea.hbm %s1, %s29
    %s31 = scalar_lea.vmem [#allocation2], 1
    %s32 = scalar_lea.sflag [#allocation3], 1
    // Predicated region
    $region6: #{tpu_custom_call.1} parent=1 // pred_check
      _
    $region7: #{tpu_custom_call.1} parent=1 // pred_check_branch
      %34 = sbr.rel target = $region9
    $region8: #{tpu_custom_call.1} parent=1 // pred_region
      %35 = sst [smem:[#allocation10]] [#allocation13]
      %36 = sst [smem:[#allocation11]] [#allocation12]
    $region9: #{tpu_custom_call.1} parent=1 // pred_fallthru
      _
    %38 = shalt.err (0)
    %s40 = sshll.u32 %s31, 4
    %s41 = int_to_ptr.vmem [resolvable:$true] %s40
    %43 = dma.hbm_to_vmem [thread:$0]  %s30, 16, %s41, %s32
    %s44 = sadd.s32 %s12, 2
    %s45 = sld [smem:[#allocation5 + %s44]]
    %s46 = smul.addr %s45, 16
    %s47 = scalar_lea.hbm %s1, %s46
    %s48 = scalar_lea.vmem [#allocation2], 2
    %s49 = scalar_lea.sflag [#allocation3], 2
    // Predicated region
    $region10: #{tpu_custom_call.1} parent=1 // pred_check
      _
    $region11: #{tpu_custom_call.1} parent=1 // pred_check_branch
      %51 = sbr.rel target = $region13
    $region12: #{tpu_custom_call.1} parent=1 // pred_region
      %52 = sst [smem:[#allocation10]] [#allocation15]
      %53 = sst [smem:[#allocation11]] [#allocation14]
    $region13: #{tpu_custom_call.1} parent=1 // pred_fallthru
      _
    %55 = shalt.err (0)
    %s57 = sshll.u32 %s48, 4
    %s58 = int_to_ptr.vmem [resolvable:$true] %s57
    %60 = dma.hbm_to_vmem [thread:$0]  %s47, 16, %s58, %s49
    %s61 = sadd.s32 %s12, 3
    %s62 = sld [smem:[#allocation5 + %s61]]
    %s63 = smul.addr %s62, 16
    %s64 = scalar_lea.hbm %s1, %s63
    %s65 = scalar_lea.vmem [#allocation2], 3
    %s66 = scalar_lea.sflag [#allocation3], 3
    // Predicated region
    $region14: #{tpu_custom_call.1} parent=1 // pred_check
      _
    $region15: #{tpu_custom_call.1} parent=1 // pred_check_branch
      %68 = sbr.rel target = $region17
    $region16: #{tpu_custom_call.1} parent=1 // pred_region
      %69 = sst [smem:[#allocation10]] [#allocation17]
      %70 = sst [smem:[#allocation11]] [#allocation16]
    $region17: #{tpu_custom_call.1} parent=1 // pred_fallthru
      _
    %72 = shalt.err (0)
    %s74 = sshll.u32 %s65, 4
    %s75 = int_to_ptr.vmem [resolvable:$true] %s74
    %77 = dma.hbm_to_vmem [thread:$0]  %s64, 16, %s75, %s66
    %s78 = sadd.s32 %s12, 4
    %s79 = sld [smem:[#allocation5 + %s78]]
    %s80 = smul.addr %s79, 16
    %s81 = scalar_lea.hbm %s1, %s80
    %s82 = scalar_lea.vmem [#allocation2], 4
    %s83 = scalar_lea.sflag [#allocation3], 4
    // Predicated region
    $region18: #{tpu_custom_call.1} parent=1 // pred_check
      _
    $region19: #{tpu_custom_call.1} parent=1 // pred_check_branch
      %85 = sbr.rel target = $region21
    $region20: #{tpu_custom_call.1} parent=1 // pred_region
      %86 = sst [smem:[#allocation10]] [#allocation19]
      %87 = sst [smem:[#allocation11]] [#allocation18]
    $region21: #{tpu_custom_call.1} parent=1 // pred_fallthru
      _
    %89 = shalt.err (0)
    %s91 = sshll.u32 %s82, 4
    %s92 = int_to_ptr.vmem [resolvable:$true] %s91
    %94 = dma.hbm_to_vmem [thread:$0]  %s81, 16, %s92, %s83
    %s95 = sadd.s32 %s12, 5
    %s96 = sld [smem:[#allocation5 + %s95]]
    %s97 = smul.addr %s96, 16
    %s98 = scalar_lea.hbm %s1, %s97
    %s99 = scalar_lea.vmem [#allocation2], 5
    %s100 = scalar_lea.sflag [#allocation3], 5
    // Predicated region
    $region22: #{tpu_custom_call.1} parent=1 // pred_check
      _
    $region23: #{tpu_custom_call.1} parent=1 // pred_check_branch
      %102 = sbr.rel target = $region25
    $region24: #{tpu_custom_call.1} parent=1 // pred_region
      %103 = sst [smem:[#allocation10]] [#allocation21]
      %104 = sst [smem:[#allocation11]] [#allocation20]
    $region25: #{tpu_custom_call.1} parent=1 // pred_fallthru
      _
    %106 = shalt.err (0)
    %s108 = sshll.u32 %s99, 4
    %s109 = int_to_ptr.vmem [resolvable:$true] %s108
    %111 = dma.hbm_to_vmem [thread:$0]  %s98, 16, %s109, %s100
    %s112 = sadd.s32 %s12, 6
    %s113 = sld [smem:[#allocation5 + %s112]]
    %s114 = smul.addr %s113, 16
    %s115 = scalar_lea.hbm %s1, %s114
    %s116 = scalar_lea.vmem [#allocation2], 6
    %s117 = scalar_lea.sflag [#allocation3], 6
    // Predicated region
    $region26: #{tpu_custom_call.1} parent=1 // pred_check
      _
    $region27: #{tpu_custom_call.1} parent=1 // pred_check_branch
      %119 = sbr.rel target = $region29
    $region28: #{tpu_custom_call.1} parent=1 // pred_region
      %120 = sst [smem:[#allocation10]] [#allocation23]
      %121 = sst [smem:[#allocation11]] [#allocation22]
    $region29: #{tpu_custom_call.1} parent=1 // pred_fallthru
      _
    %123 = shalt.err (0)
    %s125 = sshll.u32 %s116, 4
    %s126 = int_to_ptr.vmem [resolvable:$true] %s125
    %128 = dma.hbm_to_vmem [thread:$0]  %s115, 16, %s126, %s117
    %s129 = sadd.s32 %s12, 7
    %s130 = sld [smem:[#allocation5 + %s129]]
    %s131 = smul.addr %s130, 16
    %s132 = scalar_lea.hbm %s1, %s131
    %s133 = scalar_lea.vmem [#allocation2], 7
    %s134 = scalar_lea.sflag [#allocation3], 7
    // Predicated region
    $region30: #{tpu_custom_call.1} parent=1 // pred_check
      _
    $region31: #{tpu_custom_call.1} parent=1 // pred_check_branch
      %136 = sbr.rel target = $region33
    $region32: #{tpu_custom_call.1} parent=1 // pred_region
      %137 = sst [smem:[#allocation10]] [#allocation25]
      %138 = sst [smem:[#allocation11]] [#allocation24]
    $region33: #{tpu_custom_call.1} parent=1 // pred_fallthru
      _
    %140 = shalt.err (0)
    %s142 = sshll.u32 %s133, 4
    %s143 = int_to_ptr.vmem [resolvable:$true] %s142
    %145 = dma.hbm_to_vmem [thread:$0]  %s132, 16, %s143, %s134
    %s146 = sadd.s32 %s12, 8
    %s147 = sld [smem:[#allocation5 + %s146]]
    %s148 = smul.addr %s147, 16
    %s149 = scalar_lea.hbm %s1, %s148
    %s150 = scalar_lea.vmem [#allocation2], 8
    %s151 = scalar_lea.sflag [#allocation3], 8
    // Predicated region
    $region34: #{tpu_custom_call.1} parent=1 // pred_check
      _
    $region35: #{tpu_custom_call.1} parent=1 // pred_check_branch
      %153 = sbr.rel target = $region37
    $region36: #{tpu_custom_call.1} parent=1 // pred_region
      %154 = sst [smem:[#allocation10]] [#allocation27]
      %155 = sst [smem:[#allocation11]] [#allocation26]
    $region37: #{tpu_custom_call.1} parent=1 // pred_fallthru
      _
    %157 = shalt.err (0)
    %s159 = sshll.u32 %s150, 4
    %s160 = int_to_ptr.vmem [resolvable:$true] %s159
    %162 = dma.hbm_to_vmem [thread:$0]  %s149, 16, %s160, %s151
    %s163 = sadd.s32 %s12, 9
    %s164 = sld [smem:[#allocation5 + %s163]]
    %s165 = smul.addr %s164, 16
    %s166 = scalar_lea.hbm %s1, %s165
    %s167 = scalar_lea.vmem [#allocation2], 9
    %s168 = scalar_lea.sflag [#allocation3], 9
    // Predicated region
    $region38: #{tpu_custom_call.1} parent=1 // pred_check
      _
    $region39: #{tpu_custom_call.1} parent=1 // pred_check_branch
      %170 = sbr.rel target = $region41
    $region40: #{tpu_custom_call.1} parent=1 // pred_region
      %171 = sst [smem:[#allocation10]] [#allocation29]
      %172 = sst [smem:[#allocation11]] [#allocation28]
    $region41: #{tpu_custom_call.1} parent=1 // pred_fallthru
      _
    %174 = shalt.err (0)
    %s176 = sshll.u32 %s167, 4
    %s177 = int_to_ptr.vmem [resolvable:$true] %s176
    %179 = dma.hbm_to_vmem [thread:$0]  %s166, 16, %s177, %s168
    %s180 = sadd.s32 %s12, 10
    %s181 = sld [smem:[#allocation5 + %s180]]
    %s182 = smul.addr %s181, 16
    %s183 = scalar_lea.hbm %s1, %s182
    %s184 = scalar_lea.vmem [#allocation2], 10
    %s185 = scalar_lea.sflag [#allocation3], 10
    // Predicated region
    $region42: #{tpu_custom_call.1} parent=1 // pred_check
      _
    $region43: #{tpu_custom_call.1} parent=1 // pred_check_branch
      %187 = sbr.rel target = $region45
    $region44: #{tpu_custom_call.1} parent=1 // pred_region
      %188 = sst [smem:[#allocation10]] [#allocation31]
      %189 = sst [smem:[#allocation11]] [#allocation30]
    $region45: #{tpu_custom_call.1} parent=1 // pred_fallthru
      _
    %191 = shalt.err (0)
    %s193 = sshll.u32 %s184, 4
    %s194 = int_to_ptr.vmem [resolvable:$true] %s193
    %196 = dma.hbm_to_vmem [thread:$0]  %s183, 16, %s194, %s185
    %s197 = sadd.s32 %s12, 11
    %s198 = sld [smem:[#allocation5 + %s197]]
    %s199 = smul.addr %s198, 16
    %s200 = scalar_lea.hbm %s1, %s199
    %s201 = scalar_lea.vmem [#allocation2], 11
    %s202 = scalar_lea.sflag [#allocation3], 11
    // Predicated region
    $region46: #{tpu_custom_call.1} parent=1 // pred_check
      _
    $region47: #{tpu_custom_call.1} parent=1 // pred_check_branch
      %204 = sbr.rel target = $region49
    $region48: #{tpu_custom_call.1} parent=1 // pred_region
      %205 = sst [smem:[#allocation10]] [#allocation33]
      %206 = sst [smem:[#allocation11]] [#allocation32]
    $region49: #{tpu_custom_call.1} parent=1 // pred_fallthru
      _
    %208 = shalt.err (0)
    %s210 = sshll.u32 %s201, 4
    %s211 = int_to_ptr.vmem [resolvable:$true] %s210
    %213 = dma.hbm_to_vmem [thread:$0]  %s200, 16, %s211, %s202
    %s214 = sadd.s32 %s12, 12
    %s215 = sld [smem:[#allocation5 + %s214]]
    %s216 = smul.addr %s215, 16
    %s217 = scalar_lea.hbm %s1, %s216
    %s218 = scalar_lea.vmem [#allocation2], 12
    %s219 = scalar_lea.sflag [#allocation3], 12
    // Predicated region
    $region50: #{tpu_custom_call.1} parent=1 // pred_check
      _
    $region51: #{tpu_custom_call.1} parent=1 // pred_check_branch
      %221 = sbr.rel target = $region53
    $region52: #{tpu_custom_call.1} parent=1 // pred_region
      %222 = sst [smem:[#allocation10]] [#allocation35]
      %223 = sst [smem:[#allocation11]] [#allocation34]
    $region53: #{tpu_custom_call.1} parent=1 // pred_fallthru
      _
    %225 = shalt.err (0)
    %s227 = sshll.u32 %s218, 4
    %s228 = int_to_ptr.vmem [resolvable:$true] %s227
    %230 = dma.hbm_to_vmem [thread:$0]  %s217, 16, %s228, %s219
    %s231 = sadd.s32 %s12, 13
    %s232 = sld [smem:[#allocation5 + %s231]]
    %s233 = smul.addr %s232, 16
    %s234 = scalar_lea.hbm %s1, %s233
    %s235 = scalar_lea.vmem [#allocation2], 13
    %s236 = scalar_lea.sflag [#allocation3], 13
    // Predicated region
    $region54: #{tpu_custom_call.1} parent=1 // pred_check
      _
    $region55: #{tpu_custom_call.1} parent=1 // pred_check_branch
      %238 = sbr.rel target = $region57
    $region56: #{tpu_custom_call.1} parent=1 // pred_region
      %239 = sst [smem:[#allocation10]] [#allocation37]
      %240 = sst [smem:[#allocation11]] [#allocation36]
    $region57: #{tpu_custom_call.1} parent=1 // pred_fallthru
      _
    %242 = shalt.err (0)
    %s244 = sshll.u32 %s235, 4
    %s245 = int_to_ptr.vmem [resolvable:$true] %s244
    %247 = dma.hbm_to_vmem [thread:$0]  %s234, 16, %s245, %s236
    %s248 = sadd.s32 %s12, 14
    %s249 = sld [smem:[#allocation5 + %s248]]
    %s250 = smul.addr %s249, 16
    %s251 = scalar_lea.hbm %s1, %s250
    %s252 = scalar_lea.vmem [#allocation2], 14
    %s253 = scalar_lea.sflag [#allocation3], 14
    // Predicated region
    $region58: #{tpu_custom_call.1} parent=1 // pred_check
      _
    $region59: #{tpu_custom_call.1} parent=1 // pred_check_branch
      %255 = sbr.rel target = $region61
    $region60: #{tpu_custom_call.1} parent=1 // pred_region
      %256 = sst [smem:[#allocation10]] [#allocation39]
      %257 = sst [smem:[#allocation11]] [#allocation38]
    $region61: #{tpu_custom_call.1} parent=1 // pred_fallthru
      _
    %259 = shalt.err (0)
    %s261 = sshll.u32 %s252, 4
    %s262 = int_to_ptr.vmem [resolvable:$true] %s261
    %264 = dma.hbm_to_vmem [thread:$0]  %s251, 16, %s262, %s253
    %s265 = sadd.s32 %s12, 15
    %s266 = sld [smem:[#allocation5 + %s265]]
    %s267 = smul.addr %s266, 16
    %s268 = scalar_lea.hbm %s1, %s267
    %s269 = scalar_lea.vmem [#allocation2], 15
    %s270 = scalar_lea.sflag [#allocation3], 15
    // Predicated region
    $region62: #{tpu_custom_call.1} parent=1 // pred_check
      _
    $region63: #{tpu_custom_call.1} parent=1 // pred_check_branch
      %272 = sbr.rel target = $region65
    $region64: #{tpu_custom_call.1} parent=1 // pred_region
      %273 = sst [smem:[#allocation10]] [#allocation41]
      %274 = sst [smem:[#allocation11]] [#allocation40]
    $region65: #{tpu_custom_call.1} parent=1 // pred_fallthru
      _
    %276 = shalt.err (0)
    %s278 = sshll.u32 %s269, 4
    %s279 = int_to_ptr.vmem [resolvable:$true] %s278
    %281 = dma.hbm_to_vmem [thread:$0]  %s268, 16, %s279, %s270
    %s282 = smul.u32 1, 1
    %s283 = sshll.u32 %s282, 4
    %284 = dma.done [#allocation3], %s283
    %s285 = sshll.u32 %s282, 4
    %286 = dma.done %s32, %s285
    %s287 = sshll.u32 %s282, 4
    %288 = dma.done %s49, %s287
    %s289 = sshll.u32 %s282, 4
    %290 = dma.done %s66, %s289
    %s291 = sshll.u32 %s282, 4
    %292 = dma.done %s83, %s291
    %s293 = sshll.u32 %s282, 4
    %294 = dma.done %s100, %s293
    %s295 = sshll.u32 %s282, 4
    %296 = dma.done %s117, %s295
    %s297 = sshll.u32 %s282, 4
    %298 = dma.done %s134, %s297
    %s299 = sshll.u32 %s282, 4
    %300 = dma.done %s151, %s299
    %s301 = sshll.u32 %s282, 4
    %302 = dma.done %s168, %s301
    %s303 = sshll.u32 %s282, 4
    %304 = dma.done %s185, %s303
    %s305 = sshll.u32 %s282, 4
    %306 = dma.done %s202, %s305
    %s307 = sshll.u32 %s282, 4
    %308 = dma.done %s219, %s307
    %s309 = sshll.u32 %s282, 4
    %310 = dma.done %s236, %s309
    %s311 = sshll.u32 %s282, 4
    %312 = dma.done %s253, %s311
    %s313 = sshll.u32 %s282, 4
    %314 = dma.done %s270, %s313
    %v315 = vld [vmem:[#allocation2] sm:$0xff]
    %v316 = vld [vmem:[#allocation2 + $0x8] sm:$0xff]
    %v317 = vmul.f32 %v315, 11.313708
    %v318 = vmul.f32 %v316, 11.313708
    %319 = vst [vmem:[#allocation6] sm:$0xff] %v317
    %320 = vst [vmem:[#allocation6 + $0x8] sm:$0xff] %v318
    // Predicated region
    $region66: #{tpu_custom_call.1} parent=1 // pred_check
      _
    $region67: #{tpu_custom_call.1} parent=1 // pred_check_branch
      %322 = sbr.rel (0) target = $region69
    $region68: #{tpu_custom_call.1} parent=1 // pred_region
      %s324 = ssub.s32 256, 256
      %325 = vsyncadd [#allocation7], %s324
      %s326 = sshll.u32 [#allocation6], 4
      %s327 = int_to_ptr.vmem [resolvable:$true] %s326
      %332 = dma.vmem_to_hbm [thread:$0]  %s327, 256, %s2, [#allocation7], 128, 128, 8
    $region69: #{tpu_custom_call.1} parent=1 // pred_fallthru
      _
    // Predicated region
    $region70: #{tpu_custom_call.1} parent=1 // pred_check
      _
    $region71: #{tpu_custom_call.1} parent=1 // pred_check_branch
      %334 = sbr.rel (0) target = $region73
    $region72: #{tpu_custom_call.1} parent=1 // pred_region
      %335 = dma.done [#allocation7], 256
    $region73: #{tpu_custom_call.1} parent=1 // pred_fallthru
      _
    %336 = vsyncpa [#allocation7], 1
  %337 = vsyncmov [#allocation3]
  %s338 = vpop.sfrf %337
  %p339 = scmp.eq.s32.totalorder %s338, 0
  %p340 = pneg %p339
  %342 = shalt.err (%p340)
  %s343 = scalar_lea.sflag [#allocation3], 1
  %344 = vsyncmov %s343
  %s345 = vpop.sfrf %344
  %p346 = scmp.eq.s32.totalorder %s345, 0
  %p347 = pneg %p346
  %349 = shalt.err (%p347)
  %s350 = scalar_lea.sflag [#allocation3], 2
  %351 = vsyncmov %s350
  %s352 = vpop.sfrf %351
  %p353 = scmp.eq.s32.totalorder %s352, 0
  %p354 = pneg %p353
  %356 = shalt.err (%p354)
  %s357 = scalar_lea.sflag [#allocation3], 3
  %358 = vsyncmov %s357
  %s359 = vpop.sfrf %358
  %p360 = scmp.eq.s32.totalorder %s359, 0
  %p361 = pneg %p360
  %363 = shalt.err (%p361)
  %s364 = scalar_lea.sflag [#allocation3], 4
  %365 = vsyncmov %s364
  %s366 = vpop.sfrf %365
  %p367 = scmp.eq.s32.totalorder %s366, 0
  %p368 = pneg %p367
  %370 = shalt.err (%p368)
  %s371 = scalar_lea.sflag [#allocation3], 5
  %372 = vsyncmov %s371
  %s373 = vpop.sfrf %372
  %p374 = scmp.eq.s32.totalorder %s373, 0
  %p375 = pneg %p374
  %377 = shalt.err (%p375)
  %s378 = scalar_lea.sflag [#allocation3], 6
  %379 = vsyncmov %s378
  %s380 = vpop.sfrf %379
  %p381 = scmp.eq.s32.totalorder %s380, 0
  %p382 = pneg %p381
  %384 = shalt.err (%p382)
  %s385 = scalar_lea.sflag [#allocation3], 7
  %386 = vsyncmov %s385
  %s387 = vpop.sfrf %386
  %p388 = scmp.eq.s32.totalorder %s387, 0
  %p389 = pneg %p388
  %391 = shalt.err (%p389)
  %s392 = scalar_lea.sflag [#allocation3], 8
  %393 = vsyncmov %s392
  %s394 = vpop.sfrf %393
  %p395 = scmp.eq.s32.totalorder %s394, 0
  %p396 = pneg %p395
  %398 = shalt.err (%p396)
  %s399 = scalar_lea.sflag [#allocation3], 9
  %400 = vsyncmov %s399
  %s401 = vpop.sfrf %400
  %p402 = scmp.eq.s32.totalorder %s401, 0
  %p403 = pneg %p402
  %405 = shalt.err (%p403)
  %s406 = scalar_lea.sflag [#allocation3], 10
  %407 = vsyncmov %s406
  %s408 = vpop.sfrf %407
  %p409 = scmp.eq.s32.totalorder %s408, 0
  %p410 = pneg %p409
  %412 = shalt.err (%p410)
  %s413 = scalar_lea.sflag [#allocation3], 11
  %414 = vsyncmov %s413
  %s415 = vpop.sfrf %414
  %p416 = scmp.eq.s32.totalorder %s415, 0
  %p417 = pneg %p416
  %419 = shalt.err (%p417)
  %s420 = scalar_lea.sflag [#allocation3], 12
  %421 = vsyncmov %s420
  %s422 = vpop.sfrf %421
  %p423 = scmp.eq.s32.totalorder %s422, 0
  %p424 = pneg %p423
  %426 = shalt.err (%p424)
  %s427 = scalar_lea.sflag [#allocation3], 13
  %428 = vsyncmov %s427
  %s429 = vpop.sfrf %428
  %p430 = scmp.eq.s32.totalorder %s429, 0
  %p431 = pneg %p430
  %433 = shalt.err (%p431)
  %s434 = scalar_lea.sflag [#allocation3], 14
  %435 = vsyncmov %s434
  %s436 = vpop.sfrf %435
  %p437 = scmp.eq.s32.totalorder %s436, 0
  %p438 = pneg %p437
  %440 = shalt.err (%p438)
  %s441 = scalar_lea.sflag [#allocation3], 15
  %442 = vsyncmov %s441
  %s443 = vpop.sfrf %442
  %p444 = scmp.eq.s32.totalorder %s443, 0
  %p445 = pneg %p444
  %447 = shalt.err (%p445)
  %s448 = scalar_lea.sflag [#allocation3], 16
  %449 = vsyncmov %s448
  %s450 = vpop.sfrf %449
  %p451 = scmp.eq.s32.totalorder %s450, 0
  %p452 = pneg %p451
  %454 = shalt.err (%p452)
  %s455 = scalar_lea.sflag [#allocation3], 17
  %456 = vsyncmov %s455
  %s457 = vpop.sfrf %456
  %p458 = scmp.eq.s32.totalorder %s457, 0
  %p459 = pneg %p458
  %461 = shalt.err (%p459)
  %s462 = scalar_lea.sflag [#allocation3], 18
  %463 = vsyncmov %s462
  %s464 = vpop.sfrf %463
  %p465 = scmp.eq.s32.totalorder %s464, 0
  %p466 = pneg %p465
  %468 = shalt.err (%p466)
  %s469 = scalar_lea.sflag [#allocation3], 19
  %470 = vsyncmov %s469
  %s471 = vpop.sfrf %470
  %p472 = scmp.eq.s32.totalorder %s471, 0
  %p473 = pneg %p472
  %475 = shalt.err (%p473)
  %s476 = scalar_lea.sflag [#allocation3], 20
  %477 = vsyncmov %s476
  %s478 = vpop.sfrf %477
  %p479 = scmp.eq.s32.totalorder %s478, 0
  %p480 = pneg %p479
  %482 = shalt.err (%p480)
  %s483 = scalar_lea.sflag [#allocation3], 21
  %484 = vsyncmov %s483
  %s485 = vpop.sfrf %484
  %p486 = scmp.eq.s32.totalorder %s485, 0
  %p487 = pneg %p486
  %489 = shalt.err (%p487)
  %s490 = scalar_lea.sflag [#allocation3], 22
  %491 = vsyncmov %s490
  %s492 = vpop.sfrf %491
  %p493 = scmp.eq.s32.totalorder %s492, 0
  %p494 = pneg %p493
  %496 = shalt.err (%p494)
  %s497 = scalar_lea.sflag [#allocation3], 23
  %498 = vsyncmov %s497
  %s499 = vpop.sfrf %498
  %p500 = scmp.eq.s32.totalorder %s499, 0
  %p501 = pneg %p500
  %503 = shalt.err (%p501)
  %s504 = scalar_lea.sflag [#allocation3], 24
  %505 = vsyncmov %s504
  %s506 = vpop.sfrf %505
  %p507 = scmp.eq.s32.totalorder %s506, 0
  %p508 = pneg %p507
  %510 = shalt.err (%p508)
  %s511 = scalar_lea.sflag [#allocation3], 25
  %512 = vsyncmov %s511
  %s513 = vpop.sfrf %512
  %p514 = scmp.eq.s32.totalorder %s513, 0
  %p515 = pneg %p514
  %517 = shalt.err (%p515)
  %s518 = scalar_lea.sflag [#allocation3], 26
  %519 = vsyncmov %s518
  %s520 = vpop.sfrf %519
  %p521 = scmp.eq.s32.totalorder %s520, 0
  %p522 = pneg %p521
  %524 = shalt.err (%p522)
  %s525 = scalar_lea.sflag [#allocation3], 27
  %526 = vsyncmov %s525
  %s527 = vpop.sfrf %526
  %p528 = scmp.eq.s32.totalorder %s527, 0
  %p529 = pneg %p528
  %531 = shalt.err (%p529)
  %s532 = scalar_lea.sflag [#allocation3], 28
  %533 = vsyncmov %s532
  %s534 = vpop.sfrf %533
  %p535 = scmp.eq.s32.totalorder %s534, 0
  %p536 = pneg %p535
  %538 = shalt.err (%p536)
  %s539 = scalar_lea.sflag [#allocation3], 29
  %540 = vsyncmov %s539
  %s541 = vpop.sfrf %540
  %p542 = scmp.eq.s32.totalorder %s541, 0
  %p543 = pneg %p542
  %545 = shalt.err (%p543)
  %s546 = scalar_lea.sflag [#allocation3], 30
  %547 = vsyncmov %s546
  %s548 = vpop.sfrf %547
  %p549 = scmp.eq.s32.totalorder %s548, 0
  %p550 = pneg %p549
  %552 = shalt.err (%p550)
  %s553 = scalar_lea.sflag [#allocation3], 31
  %554 = vsyncmov %s553
  %s555 = vpop.sfrf %554
  %p556 = scmp.eq.s32.totalorder %s555, 0
  %p557 = pneg %p556
  %559 = shalt.err (%p557)

</llo_original>
